<compile_context>
chip_gen: v7x
topology: tpu7x:2x2x1
jax: 0.10.0
libtpu: 0.0.40
codegen_flags: <defaults>
</compile_context>

<pallas_src>
import functools

import jax
import jax.numpy as jnp
from jax.experimental import pallas as pl
from jax.experimental.pallas import tpu as pltpu


def _round_up(v, m):
    return (v + m - 1) // m * m


def _pick_tf(f_pad):
    """Feature-tile width: largest multiple-of-128 divisor of f_pad, capped at 512,
    preferring >= 2 grid iterations (dual-TC sharding on v7x + pipeline overlap)."""
    divs = [d for d in range(f_pad, 0, -128) if f_pad % d == 0]
    for d in divs:
        if d <= 512 and f_pad // d >= 2:
            return d
    for d in divs:
        if d <= 512:
            return d
    return 128


def _graph_smoothing_kernel(a_ref, inv_ref, x_ref, o_ref, *, steps):
    # a_ref:   [n_pad, n_pad]        adjacency edge counts (bf16/f32), VMEM-resident.
    # inv_ref: [n_pad, 1]            f32 1 / clamp(in_degree, 1).
    # x_ref:   [n_pad, tf]           f32 node-feature tile for this grid step.
    # o_ref:   [steps+1, n_pad, tf]  f32 stacked results; dense slab store per step.
    a = a_ref[...]
    h = x_ref[...]
    o_ref[0] = h
    if steps:
        # Hoist the degree-scale broadcast out of the unrolled step loop.
        inv = jnp.broadcast_to(inv_ref[...], x_ref.shape)
        for s in range(steps):  # steps is static -> unrolled
            # MXU matmul: bf16 (or f32) operands, f32 accumulation; the mean's
            # divide is a per-step f32 VPU multiply (keeps A's counts exact).
            h = jnp.dot(a, h.astype(a.dtype),
                        preferred_element_type=jnp.float32) * inv
            o_ref[s + 1] = h


def graph_smoothing(x, edge_index, smoothing_steps=3, *, matmul_dtype=jnp.bfloat16):
    """JAX/Pallas equivalent of graphSmoothing(smoothing_steps).forward(x, edge_index).

    x:          [N, F] float node features
    edge_index: [2, E] int32   (row 0 = src, row 1 = dest)
    returns:    [N, smoothing_steps+1, F] float32
    """
    x = x.astype(jnp.float32)
    n, f = x.shape
    steps = int(smoothing_steps)

    # ---- plain-JAX glue: dense adjacency (edge counts) + clamped inverse degree ----
    src = edge_index[0]
    dst = edge_index[1]
    n_pad = _round_up(n, 128)      # MXU / lane-aligned node dim
    f_pad = _round_up(f, 128)      # lane-dense feature dim

    adj = jnp.zeros((n_pad, n_pad), jnp.float32).at[dst, src].add(1.0)
    deg = jnp.sum(adj, axis=1, keepdims=True)            # in-degree per dest
    inv_deg = 1.0 / jnp.maximum(deg, 1.0)                 # clamp(min=1) then divide
    # Keep A as raw counts (exact in bf16 for multiplicity <= 256); the 1/deg scale
    # is applied per step in f32 inside the kernel, avoiding bf16 normalization drift.
    a_mat = adj.astype(matmul_dtype)

    x_pad = jnp.pad(x, ((0, n_pad - n), (0, f_pad - f)))

    tf = _pick_tf(f_pad)
    grid = (f_pad // tf,)

    # ---- VMEM budget & cost hint ----------------------------------------------------
    a_bytes = n_pad * n_pad * jnp.dtype(matmul_dtype).itemsize
    xt_bytes = n_pad * tf * 4
    ot_bytes = (steps + 1) * n_pad * tf * 4
    inv_bytes = n_pad * 4
    vmem_est = 2 * a_bytes + 2 * (xt_bytes + ot_bytes + inv_bytes)
    try:
        vmem_cap = int(pltpu.get_tpu_info().vmem_capacity_bytes)
    except Exception:
        vmem_cap = 128 * 1024 * 1024
    vmem_limit = min(max(vmem_est + (4 << 20), 32 << 20), int(0.8 * vmem_cap))

    cost = pl.CostEstimate(
        flops=2 * steps * n_pad * n_pad * f_pad,
        transcendentals=0,
        bytes_accessed=a_bytes + n_pad * f_pad * 4 + (steps + 1) * n_pad * f_pad * 4,
    )

    def _run(a_spec):
        return pl.pallas_call(
            functools.partial(_graph_smoothing_kernel, steps=steps),
            out_shape=jax.ShapeDtypeStruct((steps + 1, n_pad, f_pad), jnp.float32),
            grid=grid,
            in_specs=[
                a_spec,
                pl.BlockSpec((n_pad, 1), lambda i: (0, 0)),
                pl.BlockSpec((n_pad, tf), lambda i: (0, i)),
            ],
            # Leading steps+1 axis => every per-step store is a dense (n_pad, tf) slab.
            out_specs=pl.BlockSpec((steps + 1, n_pad, tf), lambda i: (0, 0, i)),
            compiler_params=pltpu.CompilerParams(
                dimension_semantics=("parallel",),
                vmem_limit_bytes=vmem_limit,
            ),
            cost_estimate=cost,
        )(a_mat, inv_deg, x_pad)

    try:
        # Adjacency never changes across the grid -> single-buffer it in VMEM.
        out_snf = _run(
            pl.BlockSpec((n_pad, n_pad), lambda i: (0, 0),
                         pipeline_mode=pl.Buffered(1))
        )
    except Exception:
        # Fallback for JAX versions without single-buffered pipeline_mode support;
        # the constant index_map still elides re-fetch (costs one extra A buffer).
        out_snf = _run(pl.BlockSpec((n_pad, n_pad), lambda i: (0, 0)))

    # [steps+1, n_pad, f_pad] -> [n, steps+1, f]
    return jnp.transpose(out_snf[:, :n, :f], (1, 0, 2))


def _graph_smoothing_ref(x, edge_index, smoothing_steps=3):
    """Pure-JAX reference mirroring the PyTorch loop semantics (f32)."""
    n, _ = x.shape
    src = edge_index[0]
    dst = edge_index[1]
    adj = jnp.zeros((n, n), jnp.float32).at[dst, src].add(1.0)
    deg = jnp.maximum(adj.sum(axis=1, keepdims=True), 1.0)
    h = x.astype(jnp.float32)
    xs = [h]
    for _ in range(smoothing_steps):
        h = (adj @ h) / deg
        xs.append(h)
    return jnp.stack(xs, axis=1)


if __name__ == "__main__":
    N, F, E, STEPS = 16, 32, 64, 3

    key = jax.random.PRNGKey(0)
    kx, ke = jax.random.split(key)
    x = jax.random.normal(kx, (N, F), dtype=jnp.float32)
    edge_index = jax.random.randint(ke, (2, E), 0, N, dtype=jnp.int32)

    ref = _graph_smoothing_ref(x, edge_index, smoothing_steps=STEPS)

    # Default path: bf16 MXU operands, f32 accumulation, f32 per-step degree scale.
    out = graph_smoothing(x, edge_index, smoothing_steps=STEPS)
    out = jax.block_until_ready(out)
    assert out.shape == (N, STEPS + 1, F), out.shape
    assert jnp.allclose(out, ref, atol=5e-2, rtol=5e-2), "bf16 mismatch vs reference"

    # f32-operand path: exact-semantics check at tight tolerance.
    out_f32 = graph_smoothing(
        x, edge_index, smoothing_steps=STEPS, matmul_dtype=jnp.float32
    )
    out_f32 = jax.block_until_ready(out_f32)
    assert out_f32.shape == (N, STEPS + 1, F), out_f32.shape
    assert jnp.allclose(out_f32, ref, atol=1e-5, rtol=1e-5), "f32 mismatch vs reference"

    print("KERNEL_OK")
</pallas_src>

<mosaic_0001>
module attributes {stable_mosaic.version = 11 : i64} {
  func.func @_graph_smoothing_kernel(%arg0: i32, %arg1: memref<128x128xbf16, #tpu.memory_space<vmem>>, %arg2: memref<128x1xf32, #tpu.memory_space<vmem>>, %arg3: memref<128x128xf32, #tpu.memory_space<vmem>>, %arg4: memref<4x128x128xf32, #tpu.memory_space<vmem>>) attributes {dimension_semantics = [#tpu.dimension_semantics<parallel>], iteration_bounds = array<i64: 1>, scalar_prefetch = 0 : i64, scratch_operands = 0 : i64, tpu.core_type = #tpu.core_type<tc>, window_params = [{pipeline_mode = #tpu.pipeline_mode<synchronous>, transform_indices = @transform_0, window_bounds = array<i64: 128, 128>}, {pipeline_mode = #tpu.pipeline_mode<synchronous>, transform_indices = @transform_1, window_bounds = array<i64: 128, 1>}, {transform_indices = @transform_2, window_bounds = array<i64: 128, 128>}, {transform_indices = @transform_3, window_bounds = array<i64: 4, 128, 128>}]} {
    %c0 = arith.constant 0 : index
    %c0_0 = arith.constant 0 : index
    %0 = vector.load %arg1[%c0, %c0_0] : memref<128x128xbf16, #tpu.memory_space<vmem>>, vector<128x128xbf16>
    %c0_1 = arith.constant 0 : index
    %c0_2 = arith.constant 0 : index
    %1 = vector.load %arg3[%c0_1, %c0_2] : memref<128x128xf32, #tpu.memory_space<vmem>>, vector<128x128xf32>
    %c0_3 = arith.constant 0 : index
    %c0_4 = arith.constant 0 : index
    %c0_5 = arith.constant 0 : index
    %2 = vector.load %arg4[%c0_3, %c0_4, %c0_5] : memref<4x128x128xf32, #tpu.memory_space<vmem>>, vector<1x128x128xf32>
    %3 = vector.shape_cast %2 : vector<1x128x128xf32> to vector<128x128xf32>
    %4 = vector.shape_cast %1 : vector<128x128xf32> to vector<1x128x128xf32>
    tpu.vector_store %arg4[%c0_3, %c0_4, %c0_5], %4 {strides = array<i32>} : memref<4x128x128xf32, #tpu.memory_space<vmem>>, vector<1x128x128xf32>,
    %c0_6 = arith.constant 0 : index
    %c0_7 = arith.constant 0 : index
    %5 = vector.load %arg2[%c0_6, %c0_7] : memref<128x1xf32, #tpu.memory_space<vmem>>, vector<128x1xf32>
    %6 = vector.shape_cast %5 : vector<128x1xf32> to vector<128x1xf32>
    %7 = vector.broadcast %6 : vector<128x1xf32> to vector<128x128xf32>
    %8 = arith.truncf %1 : vector<128x128xf32> to vector<128x128xbf16>
    %cst = arith.constant dense<0.000000e+00> : vector<128x128xf32>
    %9 = tpu.matmul %0, %8, %cst {dimension_numbers = #tpu.dot_dimension_numbers<[1], [0], [0], [1], [0, 0, 1, 1], [], []>} : vector<128x128xbf16>, vector<128x128xbf16>, vector<128x128xf32> -> vector<128x128xf32>
    %10 = arith.mulf %9, %7 : vector<128x128xf32>
    %c1 = arith.constant 1 : index
    %c0_8 = arith.constant 0 : index
    %c0_9 = arith.constant 0 : index
    %11 = vector.load %arg4[%c1, %c0_8, %c0_9] : memref<4x128x128xf32, #tpu.memory_space<vmem>>, vector<1x128x128xf32>
    %12 = vector.shape_cast %11 : vector<1x128x128xf32> to vector<128x128xf32>
    %13 = vector.shape_cast %10 : vector<128x128xf32> to vector<1x128x128xf32>
    tpu.vector_store %arg4[%c1, %c0_8, %c0_9], %13 {strides = array<i32>} : memref<4x128x128xf32, #tpu.memory_space<vmem>>, vector<1x128x128xf32>,
    %14 = arith.truncf %10 : vector<128x128xf32> to vector<128x128xbf16>
    %cst_10 = arith.constant dense<0.000000e+00> : vector<128x128xf32>
    %15 = tpu.matmul %0, %14, %cst_10 {dimension_numbers = #tpu.dot_dimension_numbers<[1], [0], [0], [1], [0, 0, 1, 1], [], []>} : vector<128x128xbf16>, vector<128x128xbf16>, vector<128x128xf32> -> vector<128x128xf32>
    %16 = arith.mulf %15, %7 : vector<128x128xf32>
    %c2 = arith.constant 2 : index
    %c0_11 = arith.constant 0 : index
    %c0_12 = arith.constant 0 : index
    %17 = vector.load %arg4[%c2, %c0_11, %c0_12] : memref<4x128x128xf32, #tpu.memory_space<vmem>>, vector<1x128x128xf32>
    %18 = vector.shape_cast %17 : vector<1x128x128xf32> to vector<128x128xf32>
    %19 = vector.shape_cast %16 : vector<128x128xf32> to vector<1x128x128xf32>
    tpu.vector_store %arg4[%c2, %c0_11, %c0_12], %19 {strides = array<i32>} : memref<4x128x128xf32, #tpu.memory_space<vmem>>, vector<1x128x128xf32>,
    %20 = arith.truncf %16 : vector<128x128xf32> to vector<128x128xbf16>
    %cst_13 = arith.constant dense<0.000000e+00> : vector<128x128xf32>
    %21 = tpu.matmul %0, %20, %cst_13 {dimension_numbers = #tpu.dot_dimension_numbers<[1], [0], [0], [1], [0, 0, 1, 1], [], []>} : vector<128x128xbf16>, vector<128x128xbf16>, vector<128x128xf32> -> vector<128x128xf32>
    %22 = arith.mulf %21, %7 : vector<128x128xf32>
    %c3 = arith.constant 3 : index
    %c0_14 = arith.constant 0 : index
    %c0_15 = arith.constant 0 : index
    %23 = vector.load %arg4[%c3, %c0_14, %c0_15] : memref<4x128x128xf32, #tpu.memory_space<vmem>>, vector<1x128x128xf32>
    %24 = vector.shape_cast %23 : vector<1x128x128xf32> to vector<128x128xf32>
    %25 = vector.shape_cast %22 : vector<128x128xf32> to vector<1x128x128xf32>
    tpu.vector_store %arg4[%c3, %c0_14, %c0_15], %25 {strides = array<i32>} : memref<4x128x128xf32, #tpu.memory_space<vmem>>, vector<1x128x128xf32>,
    return
  }
  func.func @transform_0(%arg0: i32) -> (i32, i32) {
    %c0_i32 = arith.constant 0 : i32
    %c0_i32_0 = arith.constant 0 : i32
    %c0_i32_1 = arith.constant 0 : i32
    return %c0_i32, %c0_i32_0 : i32, i32
  }
  func.func @transform_1(%arg0: i32) -> (i32, i32) {
    %c0_i32 = arith.constant 0 : i32
    %c0_i32_0 = arith.constant 0 : i32
    %c0_i32_1 = arith.constant 0 : i32
    return %c0_i32, %c0_i32_0 : i32, i32
  }
  func.func @transform_2(%arg0: i32) -> (i32, i32) {
    %c0_i32 = arith.constant 0 : i32
    %c0_i32_0 = arith.constant 0 : i32
    return %c0_i32, %arg0 : i32, i32
  }
  func.func @transform_3(%arg0: i32) -> (i32, i32, i32) {
    %c0_i32 = arith.constant 0 : i32
    %c0_i32_0 = arith.constant 0 : i32
    %c0_i32_1 = arith.constant 0 : i32
    return %c0_i32, %c0_i32_0, %arg0 : i32, i32, i32
  }
}

module attributes {stable_mosaic.version = 11 : i64} {
  func.func @_graph_smoothing_kernel(%arg0: i32, %arg1: memref<128x128xbf16, #tpu.memory_space<vmem>>, %arg2: memref<128x1xf32, #tpu.memory_space<vmem>>, %arg3: memref<128x128xf32, #tpu.memory_space<vmem>>, %arg4: memref<4x128x128xf32, #tpu.memory_space<vmem>>) attributes {dimension_semantics = [#tpu.dimension_semantics<parallel>], iteration_bounds = array<i64: 1>, scalar_prefetch = 0 : i64, scratch_operands = 0 : i64, tpu.core_type = #tpu.core_type<tc>, window_params = [{pipeline_mode = #tpu.pipeline_mode<synchronous>, transform_indices = @transform_0, window_bounds = array<i64: 128, 128>}, {pipeline_mode = #tpu.pipeline_mode<synchronous>, transform_indices = @transform_1, window_bounds = array<i64: 128, 1>}, {transform_indices = @transform_2, window_bounds = array<i64: 128, 128>}, {transform_indices = @transform_3, window_bounds = array<i64: 4, 128, 128>}]} {
    %c0 = arith.constant 0 : index
    %c0_0 = arith.constant 0 : index
    %0 = vector.load %arg1[%c0, %c0_0] : memref<128x128xbf16, #tpu.memory_space<vmem>>, vector<128x128xbf16>
    %c0_1 = arith.constant 0 : index
    %c0_2 = arith.constant 0 : index
    %1 = vector.load %arg3[%c0_1, %c0_2] : memref<128x128xf32, #tpu.memory_space<vmem>>, vector<128x128xf32>
    %c0_3 = arith.constant 0 : index
    %c0_4 = arith.constant 0 : index
    %c0_5 = arith.constant 0 : index
    %2 = vector.load %arg4[%c0_3, %c0_4, %c0_5] : memref<4x128x128xf32, #tpu.memory_space<vmem>>, vector<1x128x128xf32>
    %3 = vector.shape_cast %2 : vector<1x128x128xf32> to vector<128x128xf32>
    %4 = vector.shape_cast %1 : vector<128x128xf32> to vector<1x128x128xf32>
    tpu.vector_store %arg4[%c0_3, %c0_4, %c0_5], %4 {strides = array<i32>} : memref<4x128x128xf32, #tpu.memory_space<vmem>>, vector<1x128x128xf32>,
    %c0_6 = arith.constant 0 : index
    %c0_7 = arith.constant 0 : index
    %5 = vector.load %arg2[%c0_6, %c0_7] : memref<128x1xf32, #tpu.memory_space<vmem>>, vector<128x1xf32>
    %6 = vector.shape_cast %5 : vector<128x1xf32> to vector<128x1xf32>
    %7 = vector.broadcast %6 : vector<128x1xf32> to vector<128x128xf32>
    %8 = arith.truncf %1 : vector<128x128xf32> to vector<128x128xbf16>
    %cst = arith.constant dense<0.000000e+00> : vector<128x128xf32>
    %9 = tpu.matmul %0, %8, %cst {dimension_numbers = #tpu.dot_dimension_numbers<[1], [0], [0], [1], [0, 0, 1, 1], [], []>} : vector<128x128xbf16>, vector<128x128xbf16>, vector<128x128xf32> -> vector<128x128xf32>
    %10 = arith.mulf %9, %7 : vector<128x128xf32>
    %c1 = arith.constant 1 : index
    %c0_8 = arith.constant 0 : index
    %c0_9 = arith.constant 0 : index
    %11 = vector.load %arg4[%c1, %c0_8, %c0_9] : memref<4x128x128xf32, #tpu.memory_space<vmem>>, vector<1x128x128xf32>
    %12 = vector.shape_cast %11 : vector<1x128x128xf32> to vector<128x128xf32>
    %13 = vector.shape_cast %10 : vector<128x128xf32> to vector<1x128x128xf32>
    tpu.vector_store %arg4[%c1, %c0_8, %c0_9], %13 {strides = array<i32>} : memref<4x128x128xf32, #tpu.memory_space<vmem>>, vector<1x128x128xf32>,
    %14 = arith.truncf %10 : vector<128x128xf32> to vector<128x128xbf16>
    %cst_10 = arith.constant dense<0.000000e+00> : vector<128x128xf32>
    %15 = tpu.matmul %0, %14, %cst_10 {dimension_numbers = #tpu.dot_dimension_numbers<[1], [0], [0], [1], [0, 0, 1, 1], [], []>} : vector<128x128xbf16>, vector<128x128xbf16>, vector<128x128xf32> -> vector<128x128xf32>
    %16 = arith.mulf %15, %7 : vector<128x128xf32>
    %c2 = arith.constant 2 : index
    %c0_11 = arith.constant 0 : index
    %c0_12 = arith.constant 0 : index
    %17 = vector.load %arg4[%c2, %c0_11, %c0_12] : memref<4x128x128xf32, #tpu.memory_space<vmem>>, vector<1x128x128xf32>
    %18 = vector.shape_cast %17 : vector<1x128x128xf32> to vector<128x128xf32>
    %19 = vector.shape_cast %16 : vector<128x128xf32> to vector<1x128x128xf32>
    tpu.vector_store %arg4[%c2, %c0_11, %c0_12], %19 {strides = array<i32>} : memref<4x128x128xf32, #tpu.memory_space<vmem>>, vector<1x128x128xf32>,
    %20 = arith.truncf %16 : vector<128x128xf32> to vector<128x128xbf16>
    %cst_13 = arith.constant dense<0.000000e+00> : vector<128x128xf32>
    %21 = tpu.matmul %0, %20, %cst_13 {dimension_numbers = #tpu.dot_dimension_numbers<[1], [0], [0], [1], [0, 0, 1, 1], [], []>} : vector<128x128xbf16>, vector<128x128xbf16>, vector<128x128xf32> -> vector<128x128xf32>
    %22 = arith.mulf %21, %7 : vector<128x128xf32>
    %c3 = arith.constant 3 : index
    %c0_14 = arith.constant 0 : index
    %c0_15 = arith.constant 0 : index
    %23 = vector.load %arg4[%c3, %c0_14, %c0_15] : memref<4x128x128xf32, #tpu.memory_space<vmem>>, vector<1x128x128xf32>
    %24 = vector.shape_cast %23 : vector<1x128x128xf32> to vector<128x128xf32>
    %25 = vector.shape_cast %22 : vector<128x128xf32> to vector<1x128x128xf32>
    tpu.vector_store %arg4[%c3, %c0_14, %c0_15], %25 {strides = array<i32>} : memref<4x128x128xf32, #tpu.memory_space<vmem>>, vector<1x128x128xf32>,
    return
  }
  func.func @transform_0(%arg0: i32) -> (i32, i32) {
    %c0_i32 = arith.constant 0 : i32
    %c0_i32_0 = arith.constant 0 : i32
    %c0_i32_1 = arith.constant 0 : i32
    return %c0_i32, %c0_i32_0 : i32, i32
  }
  func.func @transform_1(%arg0: i32) -> (i32, i32) {
    %c0_i32 = arith.constant 0 : i32
    %c0_i32_0 = arith.constant 0 : i32
    %c0_i32_1 = arith.constant 0 : i32
    return %c0_i32, %c0_i32_0 : i32, i32
  }
  func.func @transform_2(%arg0: i32) -> (i32, i32) {
    %c0_i32 = arith.constant 0 : i32
    %c0_i32_0 = arith.constant 0 : i32
    return %c0_i32, %arg0 : i32, i32
  }
  func.func @transform_3(%arg0: i32) -> (i32, i32, i32) {
    %c0_i32 = arith.constant 0 : i32
    %c0_i32_0 = arith.constant 0 : i32
    %c0_i32_1 = arith.constant 0 : i32
    return %c0_i32, %c0_i32_0, %arg0 : i32, i32, i32
  }
}

</mosaic_0001>

<llo_original>
// kernel: tpu_custom_call.1
$region0: #{tpu_custom_call.1}
  #allocation0 [shape = 'u32[]', space=smem, size = 0x4, offset = 0x4, fixed_abs, tag = 'smem constant byte address 0x4 - core index']
  #allocation1 [shape = 'u32[144,128]{1,0:T(1,128)}', space=vmem, size = 0x12000, scoped, tag = 'internal scratch']
  %s0 = inlined_call_operand.hbm [shape: bf16[128,128], index: 0, kind: input, shape index: {}]
  %s1 = inlined_call_operand.vmem [shape: f32[128,1], index: 1, kind: input, shape index: {}]
  %s2 = inlined_call_operand.vmem [shape: f32[128,128], index: 2, kind: input, shape index: {}]
  %s3 = inlined_call_operand.hbm [shape: f32[4,128,128], index: 3, kind: output, shape index: {}]
  %s4 = sld [smem:[#allocation0]]
  $region26: #{tpu_custom_call.1} parent=0
    _
  %s6 = ssub.s32 1, %s4
  %s7 = scalar_select 0, %s6, %s4
  $region1: #{tpu_custom_call.1} parent=0
    #allocation2 [shape = 'u8[32768]{0}', space=vmem, size = 0x8000, scoped, tag = 'input window, operand 0, single buffered']
    #allocation3 [shape = 's32[1]{0}', space=sflag, size = 0x4, scoped, tag = 'scoped memory for tpu_custom_call.1']
    #allocation4 [shape = 's32[1]{0}', space=sflag, size = 0x4, scoped, tag = 'scoped memory for tpu_custom_call.1']
    #allocation5 [shape = 'u8[262144]{0}', space=vmem, size = 0x40000, scoped, tag = 'output window, operand 0, single buffered']
    %8 = vsyncpa [#allocation3], 0
    %9 = vsyncpa [#allocation4], 0
    // Predicated region
    $region2: #{tpu_custom_call.1} parent=1 // pred_check
      _
    $region3: #{tpu_custom_call.1} parent=1 // pred_check_branch
      %11 = sbr.rel (0) target = $region5
    $region4: #{tpu_custom_call.1} parent=1 // pred_region
      %s13 = ssub.s32 1024, 1024
      %14 = vsyncadd [#allocation3], %s13
      %s15 = sshll.u32 [#allocation2], 4
      %s16 = int_to_ptr.vmem [resolvable:$true] %s15
      %21 = dma.hbm_to_vmem [thread:$0]  %s0, 1024, %s16, [#allocation3], 64, 64, 4
    $region5: #{tpu_custom_call.1} parent=1 // pred_fallthru
      _
    // Predicated region
    $region6: #{tpu_custom_call.1} parent=1 // pred_check
      _
    $region7: #{tpu_custom_call.1} parent=1 // pred_check_branch
      %23 = sbr.rel (0) target = $region9
    $region8: #{tpu_custom_call.1} parent=1 // pred_region
      _
    $region9: #{tpu_custom_call.1} parent=1 // pred_fallthru
      _
    // Predicated region
    $region10: #{tpu_custom_call.1} parent=1 // pred_check
      _
    $region11: #{tpu_custom_call.1} parent=1 // pred_check_branch
      %25 = sbr.rel (0) target = $region13
    $region12: #{tpu_custom_call.1} parent=1 // pred_region
      _
    $region13: #{tpu_custom_call.1} parent=1 // pred_fallthru
      _
    // Predicated region
    $region14: #{tpu_custom_call.1} parent=1 // pred_check
      _
    $region15: #{tpu_custom_call.1} parent=1 // pred_check_branch
      %27 = sbr.rel (0) target = $region17
    $region16: #{tpu_custom_call.1} parent=1 // pred_region
      %28 = dma.done [#allocation3], 1024
    $region17: #{tpu_custom_call.1} parent=1 // pred_fallthru
      _
    %v30 = vld [vmem:[#allocation2] sm:$0xf]
    %v31 = vld [vmem:[#allocation2 + $0x4] sm:$0xf]
    %v32 = vld [vmem:[#allocation2 + $0x8] sm:$0xf]
    %v33 = vld [vmem:[#allocation2 + $0xc] sm:$0xf]
    %v34 = vld [vmem:[#allocation2 + $0x10] sm:$0xf]
    %v35 = vld [vmem:[#allocation2 + $0x14] sm:$0xf]
    %v36 = vld [vmem:[#allocation2 + $0x18] sm:$0xf]
    %v37 = vld [vmem:[#allocation2 + $0x1c] sm:$0xf]
    %v38 = vld [vmem:[#allocation2 + $0x20] sm:$0xf]
    %v39 = vld [vmem:[#allocation2 + $0x24] sm:$0xf]
    %v40 = vld [vmem:[#allocation2 + $0x28] sm:$0xf]
    %v41 = vld [vmem:[#allocation2 + $0x2c] sm:$0xf]
    %v42 = vld [vmem:[#allocation2 + $0x30] sm:$0xf]
    %v43 = vld [vmem:[#allocation2 + $0x34] sm:$0xf]
    %v44 = vld [vmem:[#allocation2 + $0x38] sm:$0xf]
    %v45 = vld [vmem:[#allocation2 + $0x3c] sm:$0xf]
    %v46 = vld [vmem:[%s2] sm:$0xff]
    %v47 = vld [vmem:[%s2 + $0x8] sm:$0xff]
    %v48 = vld [vmem:[%s2 + $0x10] sm:$0xff]
    %v49 = vld [vmem:[%s2 + $0x18] sm:$0xff]
    %v50 = vld [vmem:[%s2 + $0x20] sm:$0xff]
    %v51 = vld [vmem:[%s2 + $0x28] sm:$0xff]
    %v52 = vld [vmem:[%s2 + $0x30] sm:$0xff]
    %v53 = vld [vmem:[%s2 + $0x38] sm:$0xff]
    %v54 = vld [vmem:[%s2 + $0x40] sm:$0xff]
    %v55 = vld [vmem:[%s2 + $0x48] sm:$0xff]
    %v56 = vld [vmem:[%s2 + $0x50] sm:$0xff]
    %v57 = vld [vmem:[%s2 + $0x58] sm:$0xff]
    %v58 = vld [vmem:[%s2 + $0x60] sm:$0xff]
    %v59 = vld [vmem:[%s2 + $0x68] sm:$0xff]
    %v60 = vld [vmem:[%s2 + $0x70] sm:$0xff]
    %v61 = vld [vmem:[%s2 + $0x78] sm:$0xff]
    %62 = vst [vmem:[#allocation5] sm:$0xff] %v46
    %63 = vst [vmem:[#allocation5 + $0x8] sm:$0xff] %v47
    %64 = vst [vmem:[#allocation5 + $0x10] sm:$0xff] %v48
    %65 = vst [vmem:[#allocation5 + $0x18] sm:$0xff] %v49
    %66 = vst [vmem:[#allocation5 + $0x20] sm:$0xff] %v50
    %67 = vst [vmem:[#allocation5 + $0x28] sm:$0xff] %v51
    %68 = vst [vmem:[#allocation5 + $0x30] sm:$0xff] %v52
    %69 = vst [vmem:[#allocation5 + $0x38] sm:$0xff] %v53
    %70 = vst [vmem:[#allocation5 + $0x40] sm:$0xff] %v54
    %71 = vst [vmem:[#allocation5 + $0x48] sm:$0xff] %v55
    %72 = vst [vmem:[#allocation5 + $0x50] sm:$0xff] %v56
    %73 = vst [vmem:[#allocation5 + $0x58] sm:$0xff] %v57
    %74 = vst [vmem:[#allocation5 + $0x60] sm:$0xff] %v58
    %75 = vst [vmem:[#allocation5 + $0x68] sm:$0xff] %v59
    %76 = vst [vmem:[#allocation5 + $0x70] sm:$0xff] %v60
    %77 = vst [vmem:[#allocation5 + $0x78] sm:$0xff] %v61
    %v78 = vld [vmem:[%s1] sm:$0xff]
    %v79 = vld [vmem:[%s1 + $0x8] sm:$0xff]
    %v80 = vld [vmem:[%s1 + $0x10] sm:$0xff]
    %v81 = vld [vmem:[%s1 + $0x18] sm:$0xff]
    %v82 = vld [vmem:[%s1 + $0x20] sm:$0xff]
    %v83 = vld [vmem:[%s1 + $0x28] sm:$0xff]
    %v84 = vld [vmem:[%s1 + $0x30] sm:$0xff]
    %v85 = vld [vmem:[%s1 + $0x38] sm:$0xff]
    %v86 = vld [vmem:[%s1 + $0x40] sm:$0xff]
    %v87 = vld [vmem:[%s1 + $0x48] sm:$0xff]
    %v88 = vld [vmem:[%s1 + $0x50] sm:$0xff]
    %v89 = vld [vmem:[%s1 + $0x58] sm:$0xff]
    %v90 = vld [vmem:[%s1 + $0x60] sm:$0xff]
    %v91 = vld [vmem:[%s1 + $0x68] sm:$0xff]
    %v92 = vld [vmem:[%s1 + $0x70] sm:$0xff]
    %v93 = vld [vmem:[%s1 + $0x78] sm:$0xff]
    %95 = vset.pattern.permute.xlu0 0
    %96 = vperm.xlu0 %95, %v78
    %v97 = vpop.permute.xlu0 %96
    %100 = vset.pattern.permute.xlu0 0
    %101 = vperm.xlu0 %100, %v79
    %v102 = vpop.permute.xlu0 %101
    %105 = vset.pattern.permute.xlu0 0
    %106 = vperm.xlu0 %105, %v80
    %v107 = vpop.permute.xlu0 %106
    %110 = vset.pattern.permute.xlu0 0
    %111 = vperm.xlu0 %110, %v81
    %v112 = vpop.permute.xlu0 %111
    %115 = vset.pattern.permute.xlu0 0
    %116 = vperm.xlu0 %115, %v82
    %v117 = vpop.permute.xlu0 %116
    %120 = vset.pattern.permute.xlu0 0
    %121 = vperm.xlu0 %120, %v83
    %v122 = vpop.permute.xlu0 %121
    %125 = vset.pattern.permute.xlu0 0
    %126 = vperm.xlu0 %125, %v84
    %v127 = vpop.permute.xlu0 %126
    %130 = vset.pattern.permute.xlu0 0
    %131 = vperm.xlu0 %130, %v85
    %v132 = vpop.permute.xlu0 %131
    %135 = vset.pattern.permute.xlu0 0
    %136 = vperm.xlu0 %135, %v86
    %v137 = vpop.permute.xlu0 %136
    %140 = vset.pattern.permute.xlu0 0
    %141 = vperm.xlu0 %140, %v87
    %v142 = vpop.permute.xlu0 %141
    %145 = vset.pattern.permute.xlu0 0
    %146 = vperm.xlu0 %145, %v88
    %v147 = vpop.permute.xlu0 %146
    %150 = vset.pattern.permute.xlu0 0
    %151 = vperm.xlu0 %150, %v89
    %v152 = vpop.permute.xlu0 %151
    %155 = vset.pattern.permute.xlu0 0
    %156 = vperm.xlu0 %155, %v90
    %v157 = vpop.permute.xlu0 %156
    %160 = vset.pattern.permute.xlu0 0
    %161 = vperm.xlu0 %160, %v91
    %v162 = vpop.permute.xlu0 %161
    %165 = vset.pattern.permute.xlu0 0
    %166 = vperm.xlu0 %165, %v92
    %v167 = vpop.permute.xlu0 %166
    %170 = vset.pattern.permute.xlu0 0
    %171 = vperm.xlu0 %170, %v93
    %v172 = vpop.permute.xlu0 %171
    %v174 = vpack.c.bf16 %v47, %v46
    %v175 = vpack.c.bf16 %v49, %v48
    %v176 = vpack.c.bf16 %v51, %v50
    %v177 = vpack.c.bf16 %v53, %v52
    %v178 = vpack.c.bf16 %v55, %v54
    %v179 = vpack.c.bf16 %v57, %v56
    %v180 = vpack.c.bf16 %v59, %v58
    %v181 = vpack.c.bf16 %v61, %v60
    %v198 = vunpack.c.l.b16 %v30
    %v199 = vunpack.c.l.b16 %v31
    %v200 = vunpack.c.l.b16 %v32
    %v201 = vunpack.c.l.b16 %v33
    %v202 = vunpack.c.l.b16 %v34
    %v203 = vunpack.c.l.b16 %v35
    %v204 = vunpack.c.l.b16 %v36
    %v205 = vunpack.c.l.b16 %v37
    %v206 = vunpack.c.l.b16 %v38
    %v207 = vunpack.c.l.b16 %v39
    %v208 = vunpack.c.l.b16 %v40
    %v209 = vunpack.c.l.b16 %v41
    %v210 = vunpack.c.l.b16 %v42
    %v211 = vunpack.c.l.b16 %v43
    %v212 = vunpack.c.l.b16 %v44
    %v213 = vunpack.c.l.b16 %v45
    %v214 = vpack.c.b16 %v199, %v198
    %v215 = vpack.c.b16 %v201, %v200
    %v216 = vpack.c.b16 %v203, %v202
    %v217 = vpack.c.b16 %v205, %v204
    %v218 = vpack.c.b16 %v207, %v206
    %v219 = vpack.c.b16 %v209, %v208
    %v220 = vpack.c.b16 %v211, %v210
    %v221 = vpack.c.b16 %v213, %v212
    %230 = vmatprep.subr.bf16.mxu0 0
    %231 = vmatpush1.bf16.msra.mxu0 %v174
    %232 = vmatprep.subr.bf16.mxu0 0
    %233 = vmatpush1.bf16.msra.mxu0 %v175
    %234 = vmatprep.subr.bf16.mxu0 0
    %235 = vmatpush1.bf16.msra.mxu0 %v176
    %236 = vmatprep.subr.bf16.mxu0 0
    %237 = vmatpush1.bf16.msra.mxu0 %v177
    %238 = vmatprep.subr.bf16.mxu0 0
    %239 = vmatpush1.bf16.msra.mxu0 %v178
    %240 = vmatprep.subr.bf16.mxu0 0
    %241 = vmatpush1.bf16.msra.mxu0 %v179
    %242 = vmatprep.subr.bf16.mxu0 0
    %243 = vmatpush1.bf16.msra.mxu0 %v180
    %244 = vmatprep.subr.bf16.mxu0 0
    %245 = vmatpush1.bf16.msra.mxu0 %v181
    %246 = vmatprep.subr.bf16.mxu0 0
    %247 = vmatpush1.bf16.msra.mxu0 0
    %248 = vmatprep.subr.bf16.mxu0 0
    %249 = vmatpush1.bf16.msra.mxu0 0
    %250 = vmatprep.subr.bf16.mxu0 0
    %251 = vmatpush1.bf16.msra.mxu0 0
    %252 = vmatprep.subr.bf16.mxu0 0
    %253 = vmatpush1.bf16.msra.mxu0 0
    %254 = vmatprep.subr.bf16.mxu0 0
    %255 = vmatpush1.bf16.msra.mxu0 0
    %256 = vmatprep.subr.bf16.mxu0 0
    %257 = vmatpush1.bf16.msra.mxu0 0
    %258 = vmatprep.subr.bf16.mxu0 0
    %259 = vmatpush1.bf16.msra.mxu0 0
    %260 = vmatprep.subr.bf16.mxu0 0
    %261 = vmatpush1.bf16.msra.mxu0 0
    %262 = vmatprep.mubr.bf16.mxu0 0
    %263 = vmatmul.mubr.bf16.gmra.mrb[0].mxu0 %v214
    %v264 = vpop.f32.mrb[0].mxu0
    %v265 = vadd.f32 0.0, %v264
    %v266 = vpop.f32.mrb[0].mxu0
    %v267 = vpop.f32.mrb[0].mxu0
    %v268 = vadd.f32 0.0, %v267
    %v269 = vpop.f32.mrb[0].mxu0
    %270 = vmatprep.mubr.bf16.mxu0 0
    %271 = vmatmul.mubr.bf16.gmra.mrb[0].mxu0 %v215
    %v272 = vpop.f32.mrb[0].mxu0
    %v273 = vadd.f32 0.0, %v272
    %v274 = vpop.f32.mrb[0].mxu0
    %v275 = vpop.f32.mrb[0].mxu0
    %v276 = vadd.f32 0.0, %v275
    %v277 = vpop.f32.mrb[0].mxu0
    %278 = vmatprep.mubr.bf16.mxu0 0
    %279 = vmatmul.mubr.bf16.gmra.mrb[0].mxu0 %v216
    %v280 = vpop.f32.mrb[0].mxu0
    %v281 = vadd.f32 0.0, %v280
    %v282 = vpop.f32.mrb[0].mxu0
    %v283 = vpop.f32.mrb[0].mxu0
    %v284 = vadd.f32 0.0, %v283
    %v285 = vpop.f32.mrb[0].mxu0
    %286 = vmatprep.mubr.bf16.mxu0 0
    %287 = vmatmul.mubr.bf16.gmra.mrb[0].mxu0 %v217
    %v288 = vpop.f32.mrb[0].mxu0
    %v289 = vadd.f32 0.0, %v288
    %v290 = vpop.f32.mrb[0].mxu0
    %v291 = vpop.f32.mrb[0].mxu0
    %v292 = vadd.f32 0.0, %v291
    %v293 = vpop.f32.mrb[0].mxu0
    %294 = vmatprep.mubr.bf16.mxu0 0
    %295 = vmatmul.mubr.bf16.gmra.mrb[0].mxu0 %v218
    %v296 = vpop.f32.mrb[0].mxu0
    %v297 = vadd.f32 0.0, %v296
    %v298 = vpop.f32.mrb[0].mxu0
    %v299 = vpop.f32.mrb[0].mxu0
    %v300 = vadd.f32 0.0, %v299
    %v301 = vpop.f32.mrb[0].mxu0
    %302 = vmatprep.mubr.bf16.mxu0 0
    %303 = vmatmul.mubr.bf16.gmra.mrb[0].mxu0 %v219
    %v304 = vpop.f32.mrb[0].mxu0
    %v305 = vadd.f32 0.0, %v304
    %v306 = vpop.f32.mrb[0].mxu0
    %v307 = vpop.f32.mrb[0].mxu0
    %v308 = vadd.f32 0.0, %v307
    %v309 = vpop.f32.mrb[0].mxu0
    %310 = vmatprep.mubr.bf16.mxu0 0
    %311 = vmatmul.mubr.bf16.gmra.mrb[0].mxu0 %v220
    %v312 = vpop.f32.mrb[0].mxu0
    %v313 = vadd.f32 0.0, %v312
    %v314 = vpop.f32.mrb[0].mxu0
    %v315 = vpop.f32.mrb[0].mxu0
    %v316 = vadd.f32 0.0, %v315
    %v317 = vpop.f32.mrb[0].mxu0
    %318 = vmatprep.mubr.bf16.mxu0 0
    %319 = vmatmul.mubr.bf16.gmra.mrb[0].mxu0 %v221
    %v320 = vpop.f32.mrb[0].mxu0
    %v321 = vadd.f32 0.0, %v320
    %v322 = vpop.f32.mrb[0].mxu0
    %v323 = vpop.f32.mrb[0].mxu0
    %v324 = vadd.f32 0.0, %v323
    %v325 = vpop.f32.mrb[0].mxu0
    %326 = vdwg.mxu0
    %v327 = vmul.f32 %v265, %v97
    %v328 = vmul.f32 %v268, %v102
    %v329 = vmul.f32 %v273, %v107
    %v330 = vmul.f32 %v276, %v112
    %v331 = vmul.f32 %v281, %v117
    %v332 = vmul.f32 %v284, %v122
    %v333 = vmul.f32 %v289, %v127
    %v334 = vmul.f32 %v292, %v132
    %v335 = vmul.f32 %v297, %v137
    %v336 = vmul.f32 %v300, %v142
    %v337 = vmul.f32 %v305, %v147
    %v338 = vmul.f32 %v308, %v152
    %v339 = vmul.f32 %v313, %v157
    %v340 = vmul.f32 %v316, %v162
    %v341 = vmul.f32 %v321, %v167
    %v342 = vmul.f32 %v324, %v172
    %s343 = scalar_lea.vmem [#allocation5], 128
    %344 = vst [vmem:[%s343] sm:$0xff] %v327
    %345 = vst [vmem:[%s343 + $0x8] sm:$0xff] %v328
    %346 = vst [vmem:[%s343 + $0x10] sm:$0xff] %v329
    %347 = vst [vmem:[%s343 + $0x18] sm:$0xff] %v330
    %348 = vst [vmem:[%s343 + $0x20] sm:$0xff] %v331
    %349 = vst [vmem:[%s343 + $0x28] sm:$0xff] %v332
    %350 = vst [vmem:[%s343 + $0x30] sm:$0xff] %v333
    %351 = vst [vmem:[%s343 + $0x38] sm:$0xff] %v334
    %352 = vst [vmem:[%s343 + $0x40] sm:$0xff] %v335
    %353 = vst [vmem:[%s343 + $0x48] sm:$0xff] %v336
    %354 = vst [vmem:[%s343 + $0x50] sm:$0xff] %v337
    %355 = vst [vmem:[%s343 + $0x58] sm:$0xff] %v338
    %356 = vst [vmem:[%s343 + $0x60] sm:$0xff] %v339
    %357 = vst [vmem:[%s343 + $0x68] sm:$0xff] %v340
    %358 = vst [vmem:[%s343 + $0x70] sm:$0xff] %v341
    %359 = vst [vmem:[%s343 + $0x78] sm:$0xff] %v342
    %v360 = vpack.c.bf16 %v328, %v327
    %v361 = vpack.c.bf16 %v330, %v329
    %v362 = vpack.c.bf16 %v332, %v331
    %v363 = vpack.c.bf16 %v334, %v333
    %v364 = vpack.c.bf16 %v336, %v335
    %v365 = vpack.c.bf16 %v338, %v337
    %v366 = vpack.c.bf16 %v340, %v339
    %v367 = vpack.c.bf16 %v342, %v341
    %368 = vmatprep.subr.bf16.mxu0 0
    %369 = vmatpush1.bf16.msra.mxu0 %v360
    %370 = vmatprep.subr.bf16.mxu0 0
    %371 = vmatpush1.bf16.msra.mxu0 %v361
    %372 = vmatprep.subr.bf16.mxu0 0
    %373 = vmatpush1.bf16.msra.mxu0 %v362
    %374 = vmatprep.subr.bf16.mxu0 0
    %375 = vmatpush1.bf16.msra.mxu0 %v363
    %376 = vmatprep.subr.bf16.mxu0 0
    %377 = vmatpush1.bf16.msra.mxu0 %v364
    %378 = vmatprep.subr.bf16.mxu0 0
    %379 = vmatpush1.bf16.msra.mxu0 %v365
    %380 = vmatprep.subr.bf16.mxu0 0
    %381 = vmatpush1.bf16.msra.mxu0 %v366
    %382 = vmatprep.subr.bf16.mxu0 0
    %383 = vmatpush1.bf16.msra.mxu0 %v367
    %384 = vmatprep.subr.bf16.mxu0 0
    %385 = vmatpush1.bf16.msra.mxu0 0
    %386 = vmatprep.subr.bf16.mxu0 0
    %387 = vmatpush1.bf16.msra.mxu0 0
    %388 = vmatprep.subr.bf16.mxu0 0
    %389 = vmatpush1.bf16.msra.mxu0 0
    %390 = vmatprep.subr.bf16.mxu0 0
    %391 = vmatpush1.bf16.msra.mxu0 0
    %392 = vmatprep.subr.bf16.mxu0 0
    %393 = vmatpush1.bf16.msra.mxu0 0
    %394 = vmatprep.subr.bf16.mxu0 0
    %395 = vmatpush1.bf16.msra.mxu0 0
    %396 = vmatprep.subr.bf16.mxu0 0
    %397 = vmatpush1.bf16.msra.mxu0 0
    %398 = vmatprep.subr.bf16.mxu0 0
    %399 = vmatpush1.bf16.msra.mxu0 0
    %400 = vmatprep.mubr.bf16.mxu0 0
    %401 = vmatmul.mubr.bf16.gmra.mrb[0].mxu0 %v214
    %v402 = vpop.f32.mrb[0].mxu0
    %v403 = vadd.f32 0.0, %v402
    %v404 = vpop.f32.mrb[0].mxu0
    %v405 = vpop.f32.mrb[0].mxu0
    %v406 = vadd.f32 0.0, %v405
    %v407 = vpop.f32.mrb[0].mxu0
    %408 = vmatprep.mubr.bf16.mxu0 0
    %409 = vmatmul.mubr.bf16.gmra.mrb[0].mxu0 %v215
    %v410 = vpop.f32.mrb[0].mxu0
    %v411 = vadd.f32 0.0, %v410
    %v412 = vpop.f32.mrb[0].mxu0
    %v413 = vpop.f32.mrb[0].mxu0
    %v414 = vadd.f32 0.0, %v413
    %v415 = vpop.f32.mrb[0].mxu0
    %416 = vmatprep.mubr.bf16.mxu0 0
    %417 = vmatmul.mubr.bf16.gmra.mrb[0].mxu0 %v216
    %v418 = vpop.f32.mrb[0].mxu0
    %v419 = vadd.f32 0.0, %v418
    %v420 = vpop.f32.mrb[0].mxu0
    %v421 = vpop.f32.mrb[0].mxu0
    %v422 = vadd.f32 0.0, %v421
    %v423 = vpop.f32.mrb[0].mxu0
    %424 = vmatprep.mubr.bf16.mxu0 0
    %425 = vmatmul.mubr.bf16.gmra.mrb[0].mxu0 %v217
    %v426 = vpop.f32.mrb[0].mxu0
    %v427 = vadd.f32 0.0, %v426
    %v428 = vpop.f32.mrb[0].mxu0
    %v429 = vpop.f32.mrb[0].mxu0
    %v430 = vadd.f32 0.0, %v429
    %v431 = vpop.f32.mrb[0].mxu0
    %432 = vmatprep.mubr.bf16.mxu0 0
    %433 = vmatmul.mubr.bf16.gmra.mrb[0].mxu0 %v218
    %v434 = vpop.f32.mrb[0].mxu0
    %v435 = vadd.f32 0.0, %v434
    %v436 = vpop.f32.mrb[0].mxu0
    %v437 = vpop.f32.mrb[0].mxu0
    %v438 = vadd.f32 0.0, %v437
    %v439 = vpop.f32.mrb[0].mxu0
    %440 = vmatprep.mubr.bf16.mxu0 0
    %441 = vmatmul.mubr.bf16.gmra.mrb[0].mxu0 %v219
    %v442 = vpop.f32.mrb[0].mxu0
    %v443 = vadd.f32 0.0, %v442
    %v444 = vpop.f32.mrb[0].mxu0
    %v445 = vpop.f32.mrb[0].mxu0
    %v446 = vadd.f32 0.0, %v445
    %v447 = vpop.f32.mrb[0].mxu0
    %448 = vmatprep.mubr.bf16.mxu0 0
    %449 = vmatmul.mubr.bf16.gmra.mrb[0].mxu0 %v220
    %v450 = vpop.f32.mrb[0].mxu0
    %v451 = vadd.f32 0.0, %v450
    %v452 = vpop.f32.mrb[0].mxu0
    %v453 = vpop.f32.mrb[0].mxu0
    %v454 = vadd.f32 0.0, %v453
    %v455 = vpop.f32.mrb[0].mxu0
    %456 = vmatprep.mubr.bf16.mxu0 0
    %457 = vmatmul.mubr.bf16.gmra.mrb[0].mxu0 %v221
    %v458 = vpop.f32.mrb[0].mxu0
    %v459 = vadd.f32 0.0, %v458
    %v460 = vpop.f32.mrb[0].mxu0
    %v461 = vpop.f32.mrb[0].mxu0
    %v462 = vadd.f32 0.0, %v461
    %v463 = vpop.f32.mrb[0].mxu0
    %464 = vdwg.mxu0
    %v465 = vmul.f32 %v403, %v97
    %v466 = vmul.f32 %v406, %v102
    %v467 = vmul.f32 %v411, %v107
    %v468 = vmul.f32 %v414, %v112
    %v469 = vmul.f32 %v419, %v117
    %v470 = vmul.f32 %v422, %v122
    %v471 = vmul.f32 %v427, %v127
    %v472 = vmul.f32 %v430, %v132
    %v473 = vmul.f32 %v435, %v137
    %v474 = vmul.f32 %v438, %v142
    %v475 = vmul.f32 %v443, %v147
    %v476 = vmul.f32 %v446, %v152
    %v477 = vmul.f32 %v451, %v157
    %v478 = vmul.f32 %v454, %v162
    %v479 = vmul.f32 %v459, %v167
    %v480 = vmul.f32 %v462, %v172
    %s481 = scalar_lea.vmem [#allocation5], 256
    %482 = vst [vmem:[%s481] sm:$0xff] %v465
    %483 = vst [vmem:[%s481 + $0x8] sm:$0xff] %v466
    %484 = vst [vmem:[%s481 + $0x10] sm:$0xff] %v467
    %485 = vst [vmem:[%s481 + $0x18] sm:$0xff] %v468
    %486 = vst [vmem:[%s481 + $0x20] sm:$0xff] %v469
    %487 = vst [vmem:[%s481 + $0x28] sm:$0xff] %v470
    %488 = vst [vmem:[%s481 + $0x30] sm:$0xff] %v471
    %489 = vst [vmem:[%s481 + $0x38] sm:$0xff] %v472
    %490 = vst [vmem:[%s481 + $0x40] sm:$0xff] %v473
    %491 = vst [vmem:[%s481 + $0x48] sm:$0xff] %v474
    %492 = vst [vmem:[%s481 + $0x50] sm:$0xff] %v475
    %493 = vst [vmem:[%s481 + $0x58] sm:$0xff] %v476
    %494 = vst [vmem:[%s481 + $0x60] sm:$0xff] %v477
    %495 = vst [vmem:[%s481 + $0x68] sm:$0xff] %v478
    %496 = vst [vmem:[%s481 + $0x70] sm:$0xff] %v479
    %497 = vst [vmem:[%s481 + $0x78] sm:$0xff] %v480
    %v498 = vpack.c.bf16 %v466, %v465
    %v499 = vpack.c.bf16 %v468, %v467
    %v500 = vpack.c.bf16 %v470, %v469
    %v501 = vpack.c.bf16 %v472, %v471
    %v502 = vpack.c.bf16 %v474, %v473
    %v503 = vpack.c.bf16 %v476, %v475
    %v504 = vpack.c.bf16 %v478, %v477
    %v505 = vpack.c.bf16 %v480, %v479
    %506 = vmatprep.subr.bf16.mxu0 0
    %507 = vmatpush1.bf16.msra.mxu0 %v498
    %508 = vmatprep.subr.bf16.mxu0 0
    %509 = vmatpush1.bf16.msra.mxu0 %v499
    %510 = vmatprep.subr.bf16.mxu0 0
    %511 = vmatpush1.bf16.msra.mxu0 %v500
    %512 = vmatprep.subr.bf16.mxu0 0
    %513 = vmatpush1.bf16.msra.mxu0 %v501
    %514 = vmatprep.subr.bf16.mxu0 0
    %515 = vmatpush1.bf16.msra.mxu0 %v502
    %516 = vmatprep.subr.bf16.mxu0 0
    %517 = vmatpush1.bf16.msra.mxu0 %v503
    %518 = vmatprep.subr.bf16.mxu0 0
    %519 = vmatpush1.bf16.msra.mxu0 %v504
    %520 = vmatprep.subr.bf16.mxu0 0
    %521 = vmatpush1.bf16.msra.mxu0 %v505
    %522 = vmatprep.subr.bf16.mxu0 0
    %523 = vmatpush1.bf16.msra.mxu0 0
    %524 = vmatprep.subr.bf16.mxu0 0
    %525 = vmatpush1.bf16.msra.mxu0 0
    %526 = vmatprep.subr.bf16.mxu0 0
    %527 = vmatpush1.bf16.msra.mxu0 0
    %528 = vmatprep.subr.bf16.mxu0 0
    %529 = vmatpush1.bf16.msra.mxu0 0
    %530 = vmatprep.subr.bf16.mxu0 0
    %531 = vmatpush1.bf16.msra.mxu0 0
    %532 = vmatprep.subr.bf16.mxu0 0
    %533 = vmatpush1.bf16.msra.mxu0 0
    %534 = vmatprep.subr.bf16.mxu0 0
    %535 = vmatpush1.bf16.msra.mxu0 0
    %536 = vmatprep.subr.bf16.mxu0 0
    %537 = vmatpush1.bf16.msra.mxu0 0
    %538 = vmatprep.mubr.bf16.mxu0 0
    %539 = vmatmul.mubr.bf16.gmra.mrb[0].mxu0 %v214
    %v540 = vpop.f32.mrb[0].mxu0
    %v541 = vadd.f32 0.0, %v540
    %v542 = vpop.f32.mrb[0].mxu0
    %v543 = vpop.f32.mrb[0].mxu0
    %v544 = vadd.f32 0.0, %v543
    %v545 = vpop.f32.mrb[0].mxu0
    %546 = vmatprep.mubr.bf16.mxu0 0
    %547 = vmatmul.mubr.bf16.gmra.mrb[0].mxu0 %v215
    %v548 = vpop.f32.mrb[0].mxu0
    %v549 = vadd.f32 0.0, %v548
    %v550 = vpop.f32.mrb[0].mxu0
    %v551 = vpop.f32.mrb[0].mxu0
    %v552 = vadd.f32 0.0, %v551
    %v553 = vpop.f32.mrb[0].mxu0
    %554 = vmatprep.mubr.bf16.mxu0 0
    %555 = vmatmul.mubr.bf16.gmra.mrb[0].mxu0 %v216
    %v556 = vpop.f32.mrb[0].mxu0
    %v557 = vadd.f32 0.0, %v556
    %v558 = vpop.f32.mrb[0].mxu0
    %v559 = vpop.f32.mrb[0].mxu0
    %v560 = vadd.f32 0.0, %v559
    %v561 = vpop.f32.mrb[0].mxu0
    %562 = vmatprep.mubr.bf16.mxu0 0
    %563 = vmatmul.mubr.bf16.gmra.mrb[0].mxu0 %v217
    %v564 = vpop.f32.mrb[0].mxu0
    %v565 = vadd.f32 0.0, %v564
    %v566 = vpop.f32.mrb[0].mxu0
    %v567 = vpop.f32.mrb[0].mxu0
    %v568 = vadd.f32 0.0, %v567
    %v569 = vpop.f32.mrb[0].mxu0
    %570 = vmatprep.mubr.bf16.mxu0 0
    %571 = vmatmul.mubr.bf16.gmra.mrb[0].mxu0 %v218
    %v572 = vpop.f32.mrb[0].mxu0
    %v573 = vadd.f32 0.0, %v572
    %v574 = vpop.f32.mrb[0].mxu0
    %v575 = vpop.f32.mrb[0].mxu0
    %v576 = vadd.f32 0.0, %v575
    %v577 = vpop.f32.mrb[0].mxu0
    %578 = vmatprep.mubr.bf16.mxu0 0
    %579 = vmatmul.mubr.bf16.gmra.mrb[0].mxu0 %v219
    %v580 = vpop.f32.mrb[0].mxu0
    %v581 = vadd.f32 0.0, %v580
    %v582 = vpop.f32.mrb[0].mxu0
    %v583 = vpop.f32.mrb[0].mxu0
    %v584 = vadd.f32 0.0, %v583
    %v585 = vpop.f32.mrb[0].mxu0
    %586 = vmatprep.mubr.bf16.mxu0 0
    %587 = vmatmul.mubr.bf16.gmra.mrb[0].mxu0 %v220
    %v588 = vpop.f32.mrb[0].mxu0
    %v589 = vadd.f32 0.0, %v588
    %v590 = vpop.f32.mrb[0].mxu0
    %v591 = vpop.f32.mrb[0].mxu0
    %v592 = vadd.f32 0.0, %v591
    %v593 = vpop.f32.mrb[0].mxu0
    %594 = vmatprep.mubr.bf16.mxu0 0
    %595 = vmatmul.mubr.bf16.gmra.mrb[0].mxu0 %v221
    %v596 = vpop.f32.mrb[0].mxu0
    %v597 = vadd.f32 0.0, %v596
    %v598 = vpop.f32.mrb[0].mxu0
    %v599 = vpop.f32.mrb[0].mxu0
    %v600 = vadd.f32 0.0, %v599
    %v601 = vpop.f32.mrb[0].mxu0
    %602 = vdwg.mxu0
    %v603 = vmul.f32 %v541, %v97
    %v604 = vmul.f32 %v544, %v102
    %v605 = vmul.f32 %v549, %v107
    %v606 = vmul.f32 %v552, %v112
    %v607 = vmul.f32 %v557, %v117
    %v608 = vmul.f32 %v560, %v122
    %v609 = vmul.f32 %v565, %v127
    %v610 = vmul.f32 %v568, %v132
    %v611 = vmul.f32 %v573, %v137
    %v612 = vmul.f32 %v576, %v142
    %v613 = vmul.f32 %v581, %v147
    %v614 = vmul.f32 %v584, %v152
    %v615 = vmul.f32 %v589, %v157
    %v616 = vmul.f32 %v592, %v162
    %v617 = vmul.f32 %v597, %v167
    %v618 = vmul.f32 %v600, %v172
    %s619 = scalar_lea.vmem [#allocation5], 384
    %620 = vst [vmem:[%s619] sm:$0xff] %v603
    %621 = vst [vmem:[%s619 + $0x8] sm:$0xff] %v604
    %622 = vst [vmem:[%s619 + $0x10] sm:$0xff] %v605
    %623 = vst [vmem:[%s619 + $0x18] sm:$0xff] %v606
    %624 = vst [vmem:[%s619 + $0x20] sm:$0xff] %v607
    %625 = vst [vmem:[%s619 + $0x28] sm:$0xff] %v608
    %626 = vst [vmem:[%s619 + $0x30] sm:$0xff] %v609
    %627 = vst [vmem:[%s619 + $0x38] sm:$0xff] %v610
    %628 = vst [vmem:[%s619 + $0x40] sm:$0xff] %v611
    %629 = vst [vmem:[%s619 + $0x48] sm:$0xff] %v612
    %630 = vst [vmem:[%s619 + $0x50] sm:$0xff] %v613
    %631 = vst [vmem:[%s619 + $0x58] sm:$0xff] %v614
    %632 = vst [vmem:[%s619 + $0x60] sm:$0xff] %v615
    %633 = vst [vmem:[%s619 + $0x68] sm:$0xff] %v616
    %634 = vst [vmem:[%s619 + $0x70] sm:$0xff] %v617
    %635 = vst [vmem:[%s619 + $0x78] sm:$0xff] %v618
    // Predicated region
    $region18: #{tpu_custom_call.1} parent=1 // pred_check
      _
    $region19: #{tpu_custom_call.1} parent=1 // pred_check_branch
      %637 = sbr.rel (0) target = $region21
    $region20: #{tpu_custom_call.1} parent=1 // pred_region
      %s639 = ssub.s32 8192, 8192
      %640 = vsyncadd [#allocation4], %s639
      %s641 = sshll.u32 [#allocation5], 4
      %s642 = int_to_ptr.vmem [resolvable:$true] %s641
      %647 = dma.vmem_to_hbm [thread:$0]  %s642, 8192, %s3, [#allocation4], 128, 128, 8
    $region21: #{tpu_custom_call.1} parent=1 // pred_fallthru
      _
    // Predicated region
    $region22: #{tpu_custom_call.1} parent=1 // pred_check
      _
    $region23: #{tpu_custom_call.1} parent=1 // pred_check_branch
      %649 = sbr.rel (0) target = $region25
    $region24: #{tpu_custom_call.1} parent=1 // pred_region
      %650 = dma.done [#allocation4], 8192
    $region25: #{tpu_custom_call.1} parent=1 // pred_fallthru
      _
    %651 = vsyncpa [#allocation3], 1
    %652 = vsyncpa [#allocation4], 1

// kernel: tpu_custom_call.1
$region0: #{tpu_custom_call.1}
  #allocation0 [shape = 'u32[]', space=smem, size = 0x4, offset = 0x4, fixed_abs, tag = 'smem constant byte address 0x4 - core index']
  #allocation1 [shape = 'u32[144,128]{1,0:T(1,128)}', space=vmem, size = 0x12000, scoped, tag = 'internal scratch']
  %s0 = inlined_call_operand.hbm [shape: bf16[128,128], index: 0, kind: input, shape index: {}]
  %s1 = inlined_call_operand.vmem [shape: f32[128,1], index: 1, kind: input, shape index: {}]
  %s2 = inlined_call_operand.vmem [shape: f32[128,128], index: 2, kind: input, shape index: {}]
  %s3 = inlined_call_operand.hbm [shape: f32[4,128,128], index: 3, kind: output, shape index: {}]
  %s4 = sld [smem:[#allocation0]]
  $region26: #{tpu_custom_call.1} parent=0
    _
  %s6 = ssub.s32 1, %s4
  %s7 = scalar_select 0, %s6, %s4
  $region1: #{tpu_custom_call.1} parent=0
    #allocation2 [shape = 'u8[32768]{0}', space=vmem, size = 0x8000, scoped, tag = 'input window, operand 0, single buffered']
    #allocation3 [shape = 's32[1]{0}', space=sflag, size = 0x4, scoped, tag = 'scoped memory for tpu_custom_call.1']
    #allocation4 [shape = 's32[1]{0}', space=sflag, size = 0x4, scoped, tag = 'scoped memory for tpu_custom_call.1']
    #allocation5 [shape = 'u8[262144]{0}', space=vmem, size = 0x40000, scoped, tag = 'output window, operand 0, single buffered']
    %8 = vsyncpa [#allocation3], 0
    %9 = vsyncpa [#allocation4], 0
    // Predicated region
    $region2: #{tpu_custom_call.1} parent=1 // pred_check
      _
    $region3: #{tpu_custom_call.1} parent=1 // pred_check_branch
      %11 = sbr.rel (0) target = $region5
    $region4: #{tpu_custom_call.1} parent=1 // pred_region
      %s13 = ssub.s32 1024, 1024
      %14 = vsyncadd [#allocation3], %s13
      %s15 = sshll.u32 [#allocation2], 4
      %s16 = int_to_ptr.vmem [resolvable:$true] %s15
      %21 = dma.hbm_to_vmem [thread:$0]  %s0, 1024, %s16, [#allocation3], 64, 64, 4
    $region5: #{tpu_custom_call.1} parent=1 // pred_fallthru
      _
    // Predicated region
    $region6: #{tpu_custom_call.1} parent=1 // pred_check
      _
    $region7: #{tpu_custom_call.1} parent=1 // pred_check_branch
      %23 = sbr.rel (0) target = $region9
    $region8: #{tpu_custom_call.1} parent=1 // pred_region
      _
    $region9: #{tpu_custom_call.1} parent=1 // pred_fallthru
      _
    // Predicated region
    $region10: #{tpu_custom_call.1} parent=1 // pred_check
      _
    $region11: #{tpu_custom_call.1} parent=1 // pred_check_branch
      %25 = sbr.rel (0) target = $region13
    $region12: #{tpu_custom_call.1} parent=1 // pred_region
      _
    $region13: #{tpu_custom_call.1} parent=1 // pred_fallthru
      _
    // Predicated region
    $region14: #{tpu_custom_call.1} parent=1 // pred_check
      _
    $region15: #{tpu_custom_call.1} parent=1 // pred_check_branch
      %27 = sbr.rel (0) target = $region17
    $region16: #{tpu_custom_call.1} parent=1 // pred_region
      %28 = dma.done [#allocation3], 1024
    $region17: #{tpu_custom_call.1} parent=1 // pred_fallthru
      _
    %v30 = vld [vmem:[#allocation2] sm:$0xf]
    %v31 = vld [vmem:[#allocation2 + $0x4] sm:$0xf]
    %v32 = vld [vmem:[#allocation2 + $0x8] sm:$0xf]
    %v33 = vld [vmem:[#allocation2 + $0xc] sm:$0xf]
    %v34 = vld [vmem:[#allocation2 + $0x10] sm:$0xf]
    %v35 = vld [vmem:[#allocation2 + $0x14] sm:$0xf]
    %v36 = vld [vmem:[#allocation2 + $0x18] sm:$0xf]
    %v37 = vld [vmem:[#allocation2 + $0x1c] sm:$0xf]
    %v38 = vld [vmem:[#allocation2 + $0x20] sm:$0xf]
    %v39 = vld [vmem:[#allocation2 + $0x24] sm:$0xf]
    %v40 = vld [vmem:[#allocation2 + $0x28] sm:$0xf]
    %v41 = vld [vmem:[#allocation2 + $0x2c] sm:$0xf]
    %v42 = vld [vmem:[#allocation2 + $0x30] sm:$0xf]
    %v43 = vld [vmem:[#allocation2 + $0x34] sm:$0xf]
    %v44 = vld [vmem:[#allocation2 + $0x38] sm:$0xf]
    %v45 = vld [vmem:[#allocation2 + $0x3c] sm:$0xf]
    %v46 = vld [vmem:[%s2] sm:$0xff]
    %v47 = vld [vmem:[%s2 + $0x8] sm:$0xff]
    %v48 = vld [vmem:[%s2 + $0x10] sm:$0xff]
    %v49 = vld [vmem:[%s2 + $0x18] sm:$0xff]
    %v50 = vld [vmem:[%s2 + $0x20] sm:$0xff]
    %v51 = vld [vmem:[%s2 + $0x28] sm:$0xff]
    %v52 = vld [vmem:[%s2 + $0x30] sm:$0xff]
    %v53 = vld [vmem:[%s2 + $0x38] sm:$0xff]
    %v54 = vld [vmem:[%s2 + $0x40] sm:$0xff]
    %v55 = vld [vmem:[%s2 + $0x48] sm:$0xff]
    %v56 = vld [vmem:[%s2 + $0x50] sm:$0xff]
    %v57 = vld [vmem:[%s2 + $0x58] sm:$0xff]
    %v58 = vld [vmem:[%s2 + $0x60] sm:$0xff]
    %v59 = vld [vmem:[%s2 + $0x68] sm:$0xff]
    %v60 = vld [vmem:[%s2 + $0x70] sm:$0xff]
    %v61 = vld [vmem:[%s2 + $0x78] sm:$0xff]
    %62 = vst [vmem:[#allocation5] sm:$0xff] %v46
    %63 = vst [vmem:[#allocation5 + $0x8] sm:$0xff] %v47
    %64 = vst [vmem:[#allocation5 + $0x10] sm:$0xff] %v48
    %65 = vst [vmem:[#allocation5 + $0x18] sm:$0xff] %v49
    %66 = vst [vmem:[#allocation5 + $0x20] sm:$0xff] %v50
    %67 = vst [vmem:[#allocation5 + $0x28] sm:$0xff] %v51
    %68 = vst [vmem:[#allocation5 + $0x30] sm:$0xff] %v52
    %69 = vst [vmem:[#allocation5 + $0x38] sm:$0xff] %v53
    %70 = vst [vmem:[#allocation5 + $0x40] sm:$0xff] %v54
    %71 = vst [vmem:[#allocation5 + $0x48] sm:$0xff] %v55
    %72 = vst [vmem:[#allocation5 + $0x50] sm:$0xff] %v56
    %73 = vst [vmem:[#allocation5 + $0x58] sm:$0xff] %v57
    %74 = vst [vmem:[#allocation5 + $0x60] sm:$0xff] %v58
    %75 = vst [vmem:[#allocation5 + $0x68] sm:$0xff] %v59
    %76 = vst [vmem:[#allocation5 + $0x70] sm:$0xff] %v60
    %77 = vst [vmem:[#allocation5 + $0x78] sm:$0xff] %v61
    %v78 = vld [vmem:[%s1] sm:$0xff]
    %v79 = vld [vmem:[%s1 + $0x8] sm:$0xff]
    %v80 = vld [vmem:[%s1 + $0x10] sm:$0xff]
    %v81 = vld [vmem:[%s1 + $0x18] sm:$0xff]
    %v82 = vld [vmem:[%s1 + $0x20] sm:$0xff]
    %v83 = vld [vmem:[%s1 + $0x28] sm:$0xff]
    %v84 = vld [vmem:[%s1 + $0x30] sm:$0xff]
    %v85 = vld [vmem:[%s1 + $0x38] sm:$0xff]
    %v86 = vld [vmem:[%s1 + $0x40] sm:$0xff]
    %v87 = vld [vmem:[%s1 + $0x48] sm:$0xff]
    %v88 = vld [vmem:[%s1 + $0x50] sm:$0xff]
    %v89 = vld [vmem:[%s1 + $0x58] sm:$0xff]
    %v90 = vld [vmem:[%s1 + $0x60] sm:$0xff]
    %v91 = vld [vmem:[%s1 + $0x68] sm:$0xff]
    %v92 = vld [vmem:[%s1 + $0x70] sm:$0xff]
    %v93 = vld [vmem:[%s1 + $0x78] sm:$0xff]
    %95 = vset.pattern.permute.xlu0 0
    %96 = vperm.xlu0 %95, %v78
    %v97 = vpop.permute.xlu0 %96
    %100 = vset.pattern.permute.xlu0 0
    %101 = vperm.xlu0 %100, %v79
    %v102 = vpop.permute.xlu0 %101
    %105 = vset.pattern.permute.xlu0 0
    %106 = vperm.xlu0 %105, %v80
    %v107 = vpop.permute.xlu0 %106
    %110 = vset.pattern.permute.xlu0 0
    %111 = vperm.xlu0 %110, %v81
    %v112 = vpop.permute.xlu0 %111
    %115 = vset.pattern.permute.xlu0 0
    %116 = vperm.xlu0 %115, %v82
    %v117 = vpop.permute.xlu0 %116
    %120 = vset.pattern.permute.xlu0 0
    %121 = vperm.xlu0 %120, %v83
    %v122 = vpop.permute.xlu0 %121
    %125 = vset.pattern.permute.xlu0 0
    %126 = vperm.xlu0 %125, %v84
    %v127 = vpop.permute.xlu0 %126
    %130 = vset.pattern.permute.xlu0 0
    %131 = vperm.xlu0 %130, %v85
    %v132 = vpop.permute.xlu0 %131
    %135 = vset.pattern.permute.xlu0 0
    %136 = vperm.xlu0 %135, %v86
    %v137 = vpop.permute.xlu0 %136
    %140 = vset.pattern.permute.xlu0 0
    %141 = vperm.xlu0 %140, %v87
    %v142 = vpop.permute.xlu0 %141
    %145 = vset.pattern.permute.xlu0 0
    %146 = vperm.xlu0 %145, %v88
    %v147 = vpop.permute.xlu0 %146
    %150 = vset.pattern.permute.xlu0 0
    %151 = vperm.xlu0 %150, %v89
    %v152 = vpop.permute.xlu0 %151
    %155 = vset.pattern.permute.xlu0 0
    %156 = vperm.xlu0 %155, %v90
    %v157 = vpop.permute.xlu0 %156
    %160 = vset.pattern.permute.xlu0 0
    %161 = vperm.xlu0 %160, %v91
    %v162 = vpop.permute.xlu0 %161
    %165 = vset.pattern.permute.xlu0 0
    %166 = vperm.xlu0 %165, %v92
    %v167 = vpop.permute.xlu0 %166
    %170 = vset.pattern.permute.xlu0 0
    %171 = vperm.xlu0 %170, %v93
    %v172 = vpop.permute.xlu0 %171
    %v174 = vpack.c.bf16 %v47, %v46
    %v175 = vpack.c.bf16 %v49, %v48
    %v176 = vpack.c.bf16 %v51, %v50
    %v177 = vpack.c.bf16 %v53, %v52
    %v178 = vpack.c.bf16 %v55, %v54
    %v179 = vpack.c.bf16 %v57, %v56
    %v180 = vpack.c.bf16 %v59, %v58
    %v181 = vpack.c.bf16 %v61, %v60
    %v198 = vunpack.c.l.b16 %v30
    %v199 = vunpack.c.l.b16 %v31
    %v200 = vunpack.c.l.b16 %v32
    %v201 = vunpack.c.l.b16 %v33
    %v202 = vunpack.c.l.b16 %v34
    %v203 = vunpack.c.l.b16 %v35
    %v204 = vunpack.c.l.b16 %v36
    %v205 = vunpack.c.l.b16 %v37
    %v206 = vunpack.c.l.b16 %v38
    %v207 = vunpack.c.l.b16 %v39
    %v208 = vunpack.c.l.b16 %v40
    %v209 = vunpack.c.l.b16 %v41
    %v210 = vunpack.c.l.b16 %v42
    %v211 = vunpack.c.l.b16 %v43
    %v212 = vunpack.c.l.b16 %v44
    %v213 = vunpack.c.l.b16 %v45
    %v214 = vpack.c.b16 %v199, %v198
    %v215 = vpack.c.b16 %v201, %v200
    %v216 = vpack.c.b16 %v203, %v202
    %v217 = vpack.c.b16 %v205, %v204
    %v218 = vpack.c.b16 %v207, %v206
    %v219 = vpack.c.b16 %v209, %v208
    %v220 = vpack.c.b16 %v211, %v210
    %v221 = vpack.c.b16 %v213, %v212
    %230 = vmatprep.subr.bf16.mxu0 0
    %231 = vmatpush1.bf16.msra.mxu0 %v174
    %232 = vmatprep.subr.bf16.mxu0 0
    %233 = vmatpush1.bf16.msra.mxu0 %v175
    %234 = vmatprep.subr.bf16.mxu0 0
    %235 = vmatpush1.bf16.msra.mxu0 %v176
    %236 = vmatprep.subr.bf16.mxu0 0
    %237 = vmatpush1.bf16.msra.mxu0 %v177
    %238 = vmatprep.subr.bf16.mxu0 0
    %239 = vmatpush1.bf16.msra.mxu0 %v178
    %240 = vmatprep.subr.bf16.mxu0 0
    %241 = vmatpush1.bf16.msra.mxu0 %v179
    %242 = vmatprep.subr.bf16.mxu0 0
    %243 = vmatpush1.bf16.msra.mxu0 %v180
    %244 = vmatprep.subr.bf16.mxu0 0
    %245 = vmatpush1.bf16.msra.mxu0 %v181
    %246 = vmatprep.subr.bf16.mxu0 0
    %247 = vmatpush1.bf16.msra.mxu0 0
    %248 = vmatprep.subr.bf16.mxu0 0
    %249 = vmatpush1.bf16.msra.mxu0 0
    %250 = vmatprep.subr.bf16.mxu0 0
    %251 = vmatpush1.bf16.msra.mxu0 0
    %252 = vmatprep.subr.bf16.mxu0 0
    %253 = vmatpush1.bf16.msra.mxu0 0
    %254 = vmatprep.subr.bf16.mxu0 0
    %255 = vmatpush1.bf16.msra.mxu0 0
    %256 = vmatprep.subr.bf16.mxu0 0
    %257 = vmatpush1.bf16.msra.mxu0 0
    %258 = vmatprep.subr.bf16.mxu0 0
    %259 = vmatpush1.bf16.msra.mxu0 0
    %260 = vmatprep.subr.bf16.mxu0 0
    %261 = vmatpush1.bf16.msra.mxu0 0
    %262 = vmatprep.mubr.bf16.mxu0 0
    %263 = vmatmul.mubr.bf16.gmra.mrb[0].mxu0 %v214
    %v264 = vpop.f32.mrb[0].mxu0
    %v265 = vadd.f32 0.0, %v264
    %v266 = vpop.f32.mrb[0].mxu0
    %v267 = vpop.f32.mrb[0].mxu0
    %v268 = vadd.f32 0.0, %v267
    %v269 = vpop.f32.mrb[0].mxu0
    %270 = vmatprep.mubr.bf16.mxu0 0
    %271 = vmatmul.mubr.bf16.gmra.mrb[0].mxu0 %v215
    %v272 = vpop.f32.mrb[0].mxu0
    %v273 = vadd.f32 0.0, %v272
    %v274 = vpop.f32.mrb[0].mxu0
    %v275 = vpop.f32.mrb[0].mxu0
    %v276 = vadd.f32 0.0, %v275
    %v277 = vpop.f32.mrb[0].mxu0
    %278 = vmatprep.mubr.bf16.mxu0 0
    %279 = vmatmul.mubr.bf16.gmra.mrb[0].mxu0 %v216
    %v280 = vpop.f32.mrb[0].mxu0
    %v281 = vadd.f32 0.0, %v280
    %v282 = vpop.f32.mrb[0].mxu0
    %v283 = vpop.f32.mrb[0].mxu0
    %v284 = vadd.f32 0.0, %v283
    %v285 = vpop.f32.mrb[0].mxu0
    %286 = vmatprep.mubr.bf16.mxu0 0
    %287 = vmatmul.mubr.bf16.gmra.mrb[0].mxu0 %v217
    %v288 = vpop.f32.mrb[0].mxu0
    %v289 = vadd.f32 0.0, %v288
    %v290 = vpop.f32.mrb[0].mxu0
    %v291 = vpop.f32.mrb[0].mxu0
    %v292 = vadd.f32 0.0, %v291
    %v293 = vpop.f32.mrb[0].mxu0
    %294 = vmatprep.mubr.bf16.mxu0 0
    %295 = vmatmul.mubr.bf16.gmra.mrb[0].mxu0 %v218
    %v296 = vpop.f32.mrb[0].mxu0
    %v297 = vadd.f32 0.0, %v296
    %v298 = vpop.f32.mrb[0].mxu0
    %v299 = vpop.f32.mrb[0].mxu0
    %v300 = vadd.f32 0.0, %v299
    %v301 = vpop.f32.mrb[0].mxu0
    %302 = vmatprep.mubr.bf16.mxu0 0
    %303 = vmatmul.mubr.bf16.gmra.mrb[0].mxu0 %v219
    %v304 = vpop.f32.mrb[0].mxu0
    %v305 = vadd.f32 0.0, %v304
    %v306 = vpop.f32.mrb[0].mxu0
    %v307 = vpop.f32.mrb[0].mxu0
    %v308 = vadd.f32 0.0, %v307
    %v309 = vpop.f32.mrb[0].mxu0
    %310 = vmatprep.mubr.bf16.mxu0 0
    %311 = vmatmul.mubr.bf16.gmra.mrb[0].mxu0 %v220
    %v312 = vpop.f32.mrb[0].mxu0
    %v313 = vadd.f32 0.0, %v312
    %v314 = vpop.f32.mrb[0].mxu0
    %v315 = vpop.f32.mrb[0].mxu0
    %v316 = vadd.f32 0.0, %v315
    %v317 = vpop.f32.mrb[0].mxu0
    %318 = vmatprep.mubr.bf16.mxu0 0
    %319 = vmatmul.mubr.bf16.gmra.mrb[0].mxu0 %v221
    %v320 = vpop.f32.mrb[0].mxu0
    %v321 = vadd.f32 0.0, %v320
    %v322 = vpop.f32.mrb[0].mxu0
    %v323 = vpop.f32.mrb[0].mxu0
    %v324 = vadd.f32 0.0, %v323
    %v325 = vpop.f32.mrb[0].mxu0
    %326 = vdwg.mxu0
    %v327 = vmul.f32 %v265, %v97
    %v328 = vmul.f32 %v268, %v102
    %v329 = vmul.f32 %v273, %v107
    %v330 = vmul.f32 %v276, %v112
    %v331 = vmul.f32 %v281, %v117
    %v332 = vmul.f32 %v284, %v122
    %v333 = vmul.f32 %v289, %v127
    %v334 = vmul.f32 %v292, %v132
    %v335 = vmul.f32 %v297, %v137
    %v336 = vmul.f32 %v300, %v142
    %v337 = vmul.f32 %v305, %v147
    %v338 = vmul.f32 %v308, %v152
    %v339 = vmul.f32 %v313, %v157
    %v340 = vmul.f32 %v316, %v162
    %v341 = vmul.f32 %v321, %v167
    %v342 = vmul.f32 %v324, %v172
    %s343 = scalar_lea.vmem [#allocation5], 128
    %344 = vst [vmem:[%s343] sm:$0xff] %v327
    %345 = vst [vmem:[%s343 + $0x8] sm:$0xff] %v328
    %346 = vst [vmem:[%s343 + $0x10] sm:$0xff] %v329
    %347 = vst [vmem:[%s343 + $0x18] sm:$0xff] %v330
    %348 = vst [vmem:[%s343 + $0x20] sm:$0xff] %v331
    %349 = vst [vmem:[%s343 + $0x28] sm:$0xff] %v332
    %350 = vst [vmem:[%s343 + $0x30] sm:$0xff] %v333
    %351 = vst [vmem:[%s343 + $0x38] sm:$0xff] %v334
    %352 = vst [vmem:[%s343 + $0x40] sm:$0xff] %v335
    %353 = vst [vmem:[%s343 + $0x48] sm:$0xff] %v336
    %354 = vst [vmem:[%s343 + $0x50] sm:$0xff] %v337
    %355 = vst [vmem:[%s343 + $0x58] sm:$0xff] %v338
    %356 = vst [vmem:[%s343 + $0x60] sm:$0xff] %v339
    %357 = vst [vmem:[%s343 + $0x68] sm:$0xff] %v340
    %358 = vst [vmem:[%s343 + $0x70] sm:$0xff] %v341
    %359 = vst [vmem:[%s343 + $0x78] sm:$0xff] %v342
    %v360 = vpack.c.bf16 %v328, %v327
    %v361 = vpack.c.bf16 %v330, %v329
    %v362 = vpack.c.bf16 %v332, %v331
    %v363 = vpack.c.bf16 %v334, %v333
    %v364 = vpack.c.bf16 %v336, %v335
    %v365 = vpack.c.bf16 %v338, %v337
    %v366 = vpack.c.bf16 %v340, %v339
    %v367 = vpack.c.bf16 %v342, %v341
    %368 = vmatprep.subr.bf16.mxu0 0
    %369 = vmatpush1.bf16.msra.mxu0 %v360
    %370 = vmatprep.subr.bf16.mxu0 0
    %371 = vmatpush1.bf16.msra.mxu0 %v361
    %372 = vmatprep.subr.bf16.mxu0 0
    %373 = vmatpush1.bf16.msra.mxu0 %v362
    %374 = vmatprep.subr.bf16.mxu0 0
    %375 = vmatpush1.bf16.msra.mxu0 %v363
    %376 = vmatprep.subr.bf16.mxu0 0
    %377 = vmatpush1.bf16.msra.mxu0 %v364
    %378 = vmatprep.subr.bf16.mxu0 0
    %379 = vmatpush1.bf16.msra.mxu0 %v365
    %380 = vmatprep.subr.bf16.mxu0 0
    %381 = vmatpush1.bf16.msra.mxu0 %v366
    %382 = vmatprep.subr.bf16.mxu0 0
    %383 = vmatpush1.bf16.msra.mxu0 %v367
    %384 = vmatprep.subr.bf16.mxu0 0
    %385 = vmatpush1.bf16.msra.mxu0 0
    %386 = vmatprep.subr.bf16.mxu0 0
    %387 = vmatpush1.bf16.msra.mxu0 0
    %388 = vmatprep.subr.bf16.mxu0 0
    %389 = vmatpush1.bf16.msra.mxu0 0
    %390 = vmatprep.subr.bf16.mxu0 0
    %391 = vmatpush1.bf16.msra.mxu0 0
    %392 = vmatprep.subr.bf16.mxu0 0
    %393 = vmatpush1.bf16.msra.mxu0 0
    %394 = vmatprep.subr.bf16.mxu0 0
    %395 = vmatpush1.bf16.msra.mxu0 0
    %396 = vmatprep.subr.bf16.mxu0 0
    %397 = vmatpush1.bf16.msra.mxu0 0
    %398 = vmatprep.subr.bf16.mxu0 0
    %399 = vmatpush1.bf16.msra.mxu0 0
    %400 = vmatprep.mubr.bf16.mxu0 0
    %401 = vmatmul.mubr.bf16.gmra.mrb[0].mxu0 %v214
    %v402 = vpop.f32.mrb[0].mxu0
    %v403 = vadd.f32 0.0, %v402
    %v404 = vpop.f32.mrb[0].mxu0
    %v405 = vpop.f32.mrb[0].mxu0
    %v406 = vadd.f32 0.0, %v405
    %v407 = vpop.f32.mrb[0].mxu0
    %408 = vmatprep.mubr.bf16.mxu0 0
    %409 = vmatmul.mubr.bf16.gmra.mrb[0].mxu0 %v215
    %v410 = vpop.f32.mrb[0].mxu0
    %v411 = vadd.f32 0.0, %v410
    %v412 = vpop.f32.mrb[0].mxu0
    %v413 = vpop.f32.mrb[0].mxu0
    %v414 = vadd.f32 0.0, %v413
    %v415 = vpop.f32.mrb[0].mxu0
    %416 = vmatprep.mubr.bf16.mxu0 0
    %417 = vmatmul.mubr.bf16.gmra.mrb[0].mxu0 %v216
    %v418 = vpop.f32.mrb[0].mxu0
    %v419 = vadd.f32 0.0, %v418
    %v420 = vpop.f32.mrb[0].mxu0
    %v421 = vpop.f32.mrb[0].mxu0
    %v422 = vadd.f32 0.0, %v421
    %v423 = vpop.f32.mrb[0].mxu0
    %424 = vmatprep.mubr.bf16.mxu0 0
    %425 = vmatmul.mubr.bf16.gmra.mrb[0].mxu0 %v217
    %v426 = vpop.f32.mrb[0].mxu0
    %v427 = vadd.f32 0.0, %v426
    %v428 = vpop.f32.mrb[0].mxu0
    %v429 = vpop.f32.mrb[0].mxu0
    %v430 = vadd.f32 0.0, %v429
    %v431 = vpop.f32.mrb[0].mxu0
    %432 = vmatprep.mubr.bf16.mxu0 0
    %433 = vmatmul.mubr.bf16.gmra.mrb[0].mxu0 %v218
    %v434 = vpop.f32.mrb[0].mxu0
    %v435 = vadd.f32 0.0, %v434
    %v436 = vpop.f32.mrb[0].mxu0
    %v437 = vpop.f32.mrb[0].mxu0
    %v438 = vadd.f32 0.0, %v437
    %v439 = vpop.f32.mrb[0].mxu0
    %440 = vmatprep.mubr.bf16.mxu0 0
    %441 = vmatmul.mubr.bf16.gmra.mrb[0].mxu0 %v219
    %v442 = vpop.f32.mrb[0].mxu0
    %v443 = vadd.f32 0.0, %v442
    %v444 = vpop.f32.mrb[0].mxu0
    %v445 = vpop.f32.mrb[0].mxu0
    %v446 = vadd.f32 0.0, %v445
    %v447 = vpop.f32.mrb[0].mxu0
    %448 = vmatprep.mubr.bf16.mxu0 0
    %449 = vmatmul.mubr.bf16.gmra.mrb[0].mxu0 %v220
    %v450 = vpop.f32.mrb[0].mxu0
    %v451 = vadd.f32 0.0, %v450
    %v452 = vpop.f32.mrb[0].mxu0
    %v453 = vpop.f32.mrb[0].mxu0
    %v454 = vadd.f32 0.0, %v453
    %v455 = vpop.f32.mrb[0].mxu0
    %456 = vmatprep.mubr.bf16.mxu0 0
    %457 = vmatmul.mubr.bf16.gmra.mrb[0].mxu0 %v221
    %v458 = vpop.f32.mrb[0].mxu0
    %v459 = vadd.f32 0.0, %v458
    %v460 = vpop.f32.mrb[0].mxu0
    %v461 = vpop.f32.mrb[0].mxu0
    %v462 = vadd.f32 0.0, %v461
    %v463 = vpop.f32.mrb[0].mxu0
    %464 = vdwg.mxu0
    %v465 = vmul.f32 %v403, %v97
    %v466 = vmul.f32 %v406, %v102
    %v467 = vmul.f32 %v411, %v107
    %v468 = vmul.f32 %v414, %v112
    %v469 = vmul.f32 %v419, %v117
    %v470 = vmul.f32 %v422, %v122
    %v471 = vmul.f32 %v427, %v127
    %v472 = vmul.f32 %v430, %v132
    %v473 = vmul.f32 %v435, %v137
    %v474 = vmul.f32 %v438, %v142
    %v475 = vmul.f32 %v443, %v147
    %v476 = vmul.f32 %v446, %v152
    %v477 = vmul.f32 %v451, %v157
    %v478 = vmul.f32 %v454, %v162
    %v479 = vmul.f32 %v459, %v167
    %v480 = vmul.f32 %v462, %v172
    %s481 = scalar_lea.vmem [#allocation5], 256
    %482 = vst [vmem:[%s481] sm:$0xff] %v465
    %483 = vst [vmem:[%s481 + $0x8] sm:$0xff] %v466
    %484 = vst [vmem:[%s481 + $0x10] sm:$0xff] %v467
    %485 = vst [vmem:[%s481 + $0x18] sm:$0xff] %v468
    %486 = vst [vmem:[%s481 + $0x20] sm:$0xff] %v469
    %487 = vst [vmem:[%s481 + $0x28] sm:$0xff] %v470
    %488 = vst [vmem:[%s481 + $0x30] sm:$0xff] %v471
    %489 = vst [vmem:[%s481 + $0x38] sm:$0xff] %v472
    %490 = vst [vmem:[%s481 + $0x40] sm:$0xff] %v473
    %491 = vst [vmem:[%s481 + $0x48] sm:$0xff] %v474
    %492 = vst [vmem:[%s481 + $0x50] sm:$0xff] %v475
    %493 = vst [vmem:[%s481 + $0x58] sm:$0xff] %v476
    %494 = vst [vmem:[%s481 + $0x60] sm:$0xff] %v477
    %495 = vst [vmem:[%s481 + $0x68] sm:$0xff] %v478
    %496 = vst [vmem:[%s481 + $0x70] sm:$0xff] %v479
    %497 = vst [vmem:[%s481 + $0x78] sm:$0xff] %v480
    %v498 = vpack.c.bf16 %v466, %v465
    %v499 = vpack.c.bf16 %v468, %v467
    %v500 = vpack.c.bf16 %v470, %v469
    %v501 = vpack.c.bf16 %v472, %v471
    %v502 = vpack.c.bf16 %v474, %v473
    %v503 = vpack.c.bf16 %v476, %v475
    %v504 = vpack.c.bf16 %v478, %v477
    %v505 = vpack.c.bf16 %v480, %v479
    %506 = vmatprep.subr.bf16.mxu0 0
    %507 = vmatpush1.bf16.msra.mxu0 %v498
    %508 = vmatprep.subr.bf16.mxu0 0
    %509 = vmatpush1.bf16.msra.mxu0 %v499
    %510 = vmatprep.subr.bf16.mxu0 0
    %511 = vmatpush1.bf16.msra.mxu0 %v500
    %512 = vmatprep.subr.bf16.mxu0 0
    %513 = vmatpush1.bf16.msra.mxu0 %v501
    %514 = vmatprep.subr.bf16.mxu0 0
    %515 = vmatpush1.bf16.msra.mxu0 %v502
    %516 = vmatprep.subr.bf16.mxu0 0
    %517 = vmatpush1.bf16.msra.mxu0 %v503
    %518 = vmatprep.subr.bf16.mxu0 0
    %519 = vmatpush1.bf16.msra.mxu0 %v504
    %520 = vmatprep.subr.bf16.mxu0 0
    %521 = vmatpush1.bf16.msra.mxu0 %v505
    %522 = vmatprep.subr.bf16.mxu0 0
    %523 = vmatpush1.bf16.msra.mxu0 0
    %524 = vmatprep.subr.bf16.mxu0 0
    %525 = vmatpush1.bf16.msra.mxu0 0
    %526 = vmatprep.subr.bf16.mxu0 0
    %527 = vmatpush1.bf16.msra.mxu0 0
    %528 = vmatprep.subr.bf16.mxu0 0
    %529 = vmatpush1.bf16.msra.mxu0 0
    %530 = vmatprep.subr.bf16.mxu0 0
    %531 = vmatpush1.bf16.msra.mxu0 0
    %532 = vmatprep.subr.bf16.mxu0 0
    %533 = vmatpush1.bf16.msra.mxu0 0
    %534 = vmatprep.subr.bf16.mxu0 0
    %535 = vmatpush1.bf16.msra.mxu0 0
    %536 = vmatprep.subr.bf16.mxu0 0
    %537 = vmatpush1.bf16.msra.mxu0 0
    %538 = vmatprep.mubr.bf16.mxu0 0
    %539 = vmatmul.mubr.bf16.gmra.mrb[0].mxu0 %v214
    %v540 = vpop.f32.mrb[0].mxu0
    %v541 = vadd.f32 0.0, %v540
    %v542 = vpop.f32.mrb[0].mxu0
    %v543 = vpop.f32.mrb[0].mxu0
    %v544 = vadd.f32 0.0, %v543
    %v545 = vpop.f32.mrb[0].mxu0
    %546 = vmatprep.mubr.bf16.mxu0 0
    %547 = vmatmul.mubr.bf16.gmra.mrb[0].mxu0 %v215
    %v548 = vpop.f32.mrb[0].mxu0
    %v549 = vadd.f32 0.0, %v548
    %v550 = vpop.f32.mrb[0].mxu0
    %v551 = vpop.f32.mrb[0].mxu0
    %v552 = vadd.f32 0.0, %v551
    %v553 = vpop.f32.mrb[0].mxu0
    %554 = vmatprep.mubr.bf16.mxu0 0
    %555 = vmatmul.mubr.bf16.gmra.mrb[0].mxu0 %v216
    %v556 = vpop.f32.mrb[0].mxu0
    %v557 = vadd.f32 0.0, %v556
    %v558 = vpop.f32.mrb[0].mxu0
    %v559 = vpop.f32.mrb[0].mxu0
    %v560 = vadd.f32 0.0, %v559
    %v561 = vpop.f32.mrb[0].mxu0
    %562 = vmatprep.mubr.bf16.mxu0 0
    %563 = vmatmul.mubr.bf16.gmra.mrb[0].mxu0 %v217
    %v564 = vpop.f32.mrb[0].mxu0
    %v565 = vadd.f32 0.0, %v564
    %v566 = vpop.f32.mrb[0].mxu0
    %v567 = vpop.f32.mrb[0].mxu0
    %v568 = vadd.f32 0.0, %v567
    %v569 = vpop.f32.mrb[0].mxu0
    %570 = vmatprep.mubr.bf16.mxu0 0
    %571 = vmatmul.mubr.bf16.gmra.mrb[0].mxu0 %v218
    %v572 = vpop.f32.mrb[0].mxu0
    %v573 = vadd.f32 0.0, %v572
    %v574 = vpop.f32.mrb[0].mxu0
    %v575 = vpop.f32.mrb[0].mxu0
    %v576 = vadd.f32 0.0, %v575
    %v577 = vpop.f32.mrb[0].mxu0
    %578 = vmatprep.mubr.bf16.mxu0 0
    %579 = vmatmul.mubr.bf16.gmra.mrb[0].mxu0 %v219
    %v580 = vpop.f32.mrb[0].mxu0
    %v581 = vadd.f32 0.0, %v580
    %v582 = vpop.f32.mrb[0].mxu0
    %v583 = vpop.f32.mrb[0].mxu0
    %v584 = vadd.f32 0.0, %v583
    %v585 = vpop.f32.mrb[0].mxu0
    %586 = vmatprep.mubr.bf16.mxu0 0
    %587 = vmatmul.mubr.bf16.gmra.mrb[0].mxu0 %v220
    %v588 = vpop.f32.mrb[0].mxu0
    %v589 = vadd.f32 0.0, %v588
    %v590 = vpop.f32.mrb[0].mxu0
    %v591 = vpop.f32.mrb[0].mxu0
    %v592 = vadd.f32 0.0, %v591
    %v593 = vpop.f32.mrb[0].mxu0
    %594 = vmatprep.mubr.bf16.mxu0 0
    %595 = vmatmul.mubr.bf16.gmra.mrb[0].mxu0 %v221
    %v596 = vpop.f32.mrb[0].mxu0
    %v597 = vadd.f32 0.0, %v596
    %v598 = vpop.f32.mrb[0].mxu0
    %v599 = vpop.f32.mrb[0].mxu0
    %v600 = vadd.f32 0.0, %v599
    %v601 = vpop.f32.mrb[0].mxu0
    %602 = vdwg.mxu0
    %v603 = vmul.f32 %v541, %v97
    %v604 = vmul.f32 %v544, %v102
    %v605 = vmul.f32 %v549, %v107
    %v606 = vmul.f32 %v552, %v112
    %v607 = vmul.f32 %v557, %v117
    %v608 = vmul.f32 %v560, %v122
    %v609 = vmul.f32 %v565, %v127
    %v610 = vmul.f32 %v568, %v132
    %v611 = vmul.f32 %v573, %v137
    %v612 = vmul.f32 %v576, %v142
    %v613 = vmul.f32 %v581, %v147
    %v614 = vmul.f32 %v584, %v152
    %v615 = vmul.f32 %v589, %v157
    %v616 = vmul.f32 %v592, %v162
    %v617 = vmul.f32 %v597, %v167
    %v618 = vmul.f32 %v600, %v172
    %s619 = scalar_lea.vmem [#allocation5], 384
    %620 = vst [vmem:[%s619] sm:$0xff] %v603
    %621 = vst [vmem:[%s619 + $0x8] sm:$0xff] %v604
    %622 = vst [vmem:[%s619 + $0x10] sm:$0xff] %v605
    %623 = vst [vmem:[%s619 + $0x18] sm:$0xff] %v606
    %624 = vst [vmem:[%s619 + $0x20] sm:$0xff] %v607
    %625 = vst [vmem:[%s619 + $0x28] sm:$0xff] %v608
    %626 = vst [vmem:[%s619 + $0x30] sm:$0xff] %v609
    %627 = vst [vmem:[%s619 + $0x38] sm:$0xff] %v610
    %628 = vst [vmem:[%s619 + $0x40] sm:$0xff] %v611
    %629 = vst [vmem:[%s619 + $0x48] sm:$0xff] %v612
    %630 = vst [vmem:[%s619 + $0x50] sm:$0xff] %v613
    %631 = vst [vmem:[%s619 + $0x58] sm:$0xff] %v614
    %632 = vst [vmem:[%s619 + $0x60] sm:$0xff] %v615
    %633 = vst [vmem:[%s619 + $0x68] sm:$0xff] %v616
    %634 = vst [vmem:[%s619 + $0x70] sm:$0xff] %v617
    %635 = vst [vmem:[%s619 + $0x78] sm:$0xff] %v618
    // Predicated region
    $region18: #{tpu_custom_call.1} parent=1 // pred_check
      _
    $region19: #{tpu_custom_call.1} parent=1 // pred_check_branch
      %637 = sbr.rel (0) target = $region21
    $region20: #{tpu_custom_call.1} parent=1 // pred_region
      %s639 = ssub.s32 8192, 8192
      %640 = vsyncadd [#allocation4], %s639
      %s641 = sshll.u32 [#allocation5], 4
      %s642 = int_to_ptr.vmem [resolvable:$true] %s641
      %647 = dma.vmem_to_hbm [thread:$0]  %s642, 8192, %s3, [#allocation4], 128, 128, 8
    $region21: #{tpu_custom_call.1} parent=1 // pred_fallthru
      _
    // Predicated region
    $region22: #{tpu_custom_call.1} parent=1 // pred_check
      _
    $region23: #{tpu_custom_call.1} parent=1 // pred_check_branch
      %649 = sbr.rel (0) target = $region25
    $region24: #{tpu_custom_call.1} parent=1 // pred_region
      %650 = dma.done [#allocation4], 8192
    $region25: #{tpu_custom_call.1} parent=1 // pred_fallthru
      _
    %651 = vsyncpa [#allocation3], 1
    %652 = vsyncpa [#allocation4], 1

</llo_original>
